<compile_context>
chip_gen: v7x
topology: tpu7x:2x2x1
jax: 0.10.0
libtpu: 0.0.40
codegen_flags: <defaults>
</compile_context>

<pallas_src>
import functools

import jax
import jax.numpy as jnp
from jax import lax
from jax.experimental import pallas as pl
from jax.experimental.pallas import tpu as pltpu


def _cross_attention_kernel(x_ref, ctx_ref, wq_ref, wk_ref, wv_ref, wo_ref,
                            bo_ref, o_ref, q_scr, acc_scr, m_scr, l_scr, *,
                            heads, dim_head, scale, compute_dtype):
    """One (batch, n_tile, m_tile) grid step.

    x_ref   : [1, TN, Dq]      query tokens (this batch elem / n tile)
    ctx_ref : [1, TM, Dc]      context tokens (this batch elem / m tile)
    wq_ref  : [Dq, H*d]        flat (head-major) to_q weight
    wk_ref  : [Dc, H*d]        flat to_k weight
    wv_ref  : [Dc, H*d]        flat to_v weight
    wo_ref  : [H*d, Dq_pad]    flat to_out weight (lane-padded)
    bo_ref  : [1, Dq_pad]      to_out bias (lane-padded)
    o_ref   : [1, TN, Dq_pad]  output (written once, on the last m tile)
    q_scr   : [TN, H*d]        scaled queries (computed once per n tile)
    acc_scr : [TN, H*d] f32    un-normalized per-head attention outputs
    m_scr   : [TN, H]   f32    running max per head
    l_scr   : [TN, H]   f32    running sum per head
    """
    mi = pl.program_id(2)
    last_m = pl.num_programs(2) - 1

    @pl.when(mi == 0)
    def _init():
        x = x_ref[0]                                              # [TN, Dq]
        # Single full-width projection; fold 1/sqrt(d) into q here.
        q = jnp.dot(x, wq_ref[...], preferred_element_type=jnp.float32)
        q_scr[...] = (q * scale).astype(q_scr.dtype)
        m_scr[...] = jnp.full_like(m_scr, -jnp.inf)
        l_scr[...] = jnp.zeros_like(l_scr)
        acc_scr[...] = jnp.zeros_like(acc_scr)

    ctx = ctx_ref[0]                                              # [TM, Dc]
    # Full-width K/V projections for this context tile (all heads at once).
    k = jnp.dot(ctx, wk_ref[...],
                preferred_element_type=jnp.float32).astype(compute_dtype)
    v = jnp.dot(ctx, wv_ref[...],
                preferred_element_type=jnp.float32).astype(compute_dtype)
    q = q_scr[...]                                                # [TN, H*d]

    # Online-softmax update per head (statically unrolled; lane slices of the
    # flat [*, H*d] projections are free static slices).
    for h in range(heads):
        lo, hi = h * dim_head, (h + 1) * dim_head
        q_h = q[:, lo:hi]                                         # [TN, d]
        k_h = k[:, lo:hi]                                         # [TM, d]
        v_h = v[:, lo:hi]                                         # [TM, d]
        # sim[n, m] = sum_d q[n, d] * k[m, d]  (no materialized transpose)
        s = lax.dot_general(q_h, k_h, (((1,), (1,)), ((), ())),
                            preferred_element_type=jnp.float32)   # [TN, TM]
        m_prev = m_scr[:, h:h + 1]                                # [TN, 1]
        m_new = jnp.maximum(m_prev, jnp.max(s, axis=-1, keepdims=True))
        alpha = jnp.exp(m_prev - m_new)                           # [TN, 1]
        p = jnp.exp(s - m_new)                                    # [TN, TM]
        l_scr[:, h:h + 1] = (alpha * l_scr[:, h:h + 1]
                             + jnp.sum(p, axis=-1, keepdims=True))
        acc_scr[:, lo:hi] = (alpha * acc_scr[:, lo:hi]
                             + jnp.dot(p.astype(compute_dtype), v_h,
                                       preferred_element_type=jnp.float32))
        m_scr[:, h:h + 1] = m_new

    @pl.when(mi == last_m)
    def _finalize():
        inv_l = 1.0 / l_scr[...]                                  # exact, [TN, H]
        for h in range(heads):
            lo, hi = h * dim_head, (h + 1) * dim_head
            acc_scr[:, lo:hi] *= inv_l[:, h:h + 1]
        o_slab = acc_scr[...].astype(compute_dtype)               # [TN, H*d]
        # Single output-projection matmul with K = H*d, then bias + one
        # lane-dense store.
        out = jnp.dot(o_slab, wo_ref[...],
                      preferred_element_type=jnp.float32)
        out = out + bo_ref[...].astype(jnp.float32)               # [TN, Dq_pad]
        o_ref[...] = out[None].astype(o_ref.dtype)


def _pick_tile(extent, preferred):
    """Largest multiple-of-8 divisor of `extent` that is <= preferred."""
    if extent <= preferred:
        return extent
    start = preferred - (preferred % 8)
    for t in range(start, 7, -8):
        if extent % t == 0:
            return t
    # TODO(synk): ragged extents (no multiple-of-8 divisor) fall back to a
    # single full-extent block; add in-kernel masking to tile those too.
    return extent


def cross_attention(x, context, w_q, w_k, w_v, w_out, b_out, *, heads,
                    dim_head, q_tile=256, kv_tile=512):
    """Fused CrossAttention forward (eval path: mask=None, dropout p=0).

    x       : [B, N, Dq]
    context : [B, M, Dc] or None (self-attention: context = x)
    w_q     : [H*d, Dq]   (PyTorch to_q.weight layout)
    w_k,w_v : [H*d, Dc]
    w_out   : [Dq, H*d]   (to_out[0].weight)
    b_out   : [Dq]
    Returns [B, N, Dq].
    """
    # TODO(synk): optional `mask` argument and Dropout(p>0) training path are
    # not implemented; this matches the eval forward with mask=None, p=0.
    if context is None:
        context = x
    b, n, dq = x.shape
    _, m, dc = context.shape
    inner = heads * dim_head
    assert w_q.shape == (inner, dq)
    assert w_k.shape == (inner, dc) and w_v.shape == (inner, dc)
    assert w_out.shape == (dq, inner) and b_out.shape == (dq,)
    scale = float(dim_head) ** -0.5

    # Flat, head-major weight layout -> full-width projection matmuls.
    wq_f = jnp.transpose(w_q)                                    # [Dq, H*d]
    wk_f = jnp.transpose(w_k)                                    # [Dc, H*d]
    wv_f = jnp.transpose(w_v)                                    # [Dc, H*d]
    wo_f = jnp.transpose(w_out)                                  # [H*d, Dq]

    # Lane-dense output store: pad Dq to a multiple of 128 (wrapper-only).
    dq_pad = ((dq + 127) // 128) * 128
    if dq_pad != dq:
        wo_f = jnp.pad(wo_f, ((0, 0), (0, dq_pad - dq)))
        bo = jnp.pad(b_out, (0, dq_pad - dq))
    else:
        bo = b_out
    bo2 = bo.reshape(1, dq_pad)

    tile_n = _pick_tile(n, q_tile)
    tile_m = _pick_tile(m, kv_tile)
    grid = (b, n // tile_n, m // tile_m)

    kernel = functools.partial(_cross_attention_kernel, heads=heads,
                               dim_head=dim_head, scale=scale,
                               compute_dtype=x.dtype)

    # Advisory cost estimate so XLA schedules surrounding ops sensibly.
    flops = 2 * b * (n * dq * inner + 2 * m * dc * inner
                     + 2 * heads * n * m * dim_head + n * inner * dq_pad)
    itemsize = x.dtype.itemsize
    bytes_accessed = itemsize * (b * n * dq + b * m * dc + b * n * dq_pad
                                 + dq * inner + 2 * dc * inner + inner * dq_pad)
    cost = pl.CostEstimate(flops=flops, transcendentals=b * heads * n * m,
                           bytes_accessed=bytes_accessed)

    out = pl.pallas_call(
        kernel,
        out_shape=jax.ShapeDtypeStruct((b, n, dq_pad), x.dtype),
        grid_spec=pltpu.PrefetchScalarGridSpec(
            num_scalar_prefetch=0,
            grid=grid,                              # (batch, n tiles, m tiles)
            in_specs=[
                pl.BlockSpec((1, tile_n, dq), lambda bi, ni, mi: (bi, ni, 0)),
                pl.BlockSpec((1, tile_m, dc), lambda bi, ni, mi: (bi, 0, mi)),
                pl.BlockSpec((dq, inner), lambda bi, ni, mi: (0, 0)),
                pl.BlockSpec((dc, inner), lambda bi, ni, mi: (0, 0)),
                pl.BlockSpec((dc, inner), lambda bi, ni, mi: (0, 0)),
                pl.BlockSpec((inner, dq_pad), lambda bi, ni, mi: (0, 0)),
                pl.BlockSpec((1, dq_pad), lambda bi, ni, mi: (0, 0)),
            ],
            out_specs=pl.BlockSpec((1, tile_n, dq_pad),
                                   lambda bi, ni, mi: (bi, ni, 0)),
            scratch_shapes=[
                pltpu.VMEM((tile_n, inner), x.dtype),      # scaled q
                pltpu.VMEM((tile_n, inner), jnp.float32),  # output slab acc
                pltpu.VMEM((tile_n, heads), jnp.float32),  # running max / head
                pltpu.VMEM((tile_n, heads), jnp.float32),  # running sum / head
            ]),
        compiler_params=pltpu.CompilerParams(
            dimension_semantics=("parallel", "parallel", "arbitrary"),
            vmem_limit_bytes=48 * 1024 * 1024),
        cost_estimate=cost,
    )(x, context, wq_f, wk_f, wv_f, wo_f, bo2)

    if dq_pad != dq:
        out = out[..., :dq]
    return out


def cross_attention_ref(x, context, w_q, w_k, w_v, w_out, b_out, *, heads,
                        dim_head):
    """Pure-JAX reference matching the PyTorch module (mask=None, eval)."""
    if context is None:
        context = x
    b, n, _ = x.shape
    m = context.shape[1]
    inner = heads * dim_head
    q = jnp.einsum('bnq,iq->bni', x, w_q)
    k = jnp.einsum('bmc,ic->bmi', context, w_k)
    v = jnp.einsum('bmc,ic->bmi', context, w_v)

    def split(t, length):
        return t.reshape(b, length, heads, dim_head).transpose(0, 2, 1, 3)

    qh, kh, vh = split(q, n), split(k, m), split(v, m)
    sim = jnp.einsum('bhid,bhjd->bhij', qh, kh) * (dim_head ** -0.5)
    attn = jax.nn.softmax(sim.astype(jnp.float32), axis=-1).astype(x.dtype)
    out = jnp.einsum('bhij,bhjd->bhid', attn, vh)
    out = out.transpose(0, 2, 1, 3).reshape(b, n, inner)
    return jnp.einsum('bni,oi->bno', out, w_out) + b_out[None, None, :]


if __name__ == "__main__":
    # Small deterministic config consistent with the module.
    batch = 2
    n_query = 16
    n_context = 32
    query_dim = 64
    context_dim = 32
    heads = 4
    dim_head = 16
    inner = heads * dim_head

    key = jax.random.PRNGKey(0)
    kx, kc, kq, kk, kv, kw, kb = jax.random.split(key, 7)

    x = jax.random.normal(kx, (batch, n_query, query_dim), jnp.float32)
    context = jax.random.normal(kc, (batch, n_context, context_dim), jnp.float32)
    w_q = jax.random.normal(kq, (inner, query_dim), jnp.float32) * 0.05
    w_k = jax.random.normal(kk, (inner, context_dim), jnp.float32) * 0.05
    w_v = jax.random.normal(kv, (inner, context_dim), jnp.float32) * 0.05
    w_out = jax.random.normal(kw, (query_dim, inner), jnp.float32) * 0.05
    b_out = jax.random.normal(kb, (query_dim,), jnp.float32) * 0.01

    out = cross_attention(x, context, w_q, w_k, w_v, w_out, b_out,
                          heads=heads, dim_head=dim_head)
    out = jax.block_until_ready(out)

    ref = cross_attention_ref(x, context, w_q, w_k, w_v, w_out, b_out,
                              heads=heads, dim_head=dim_head)
    ref = jax.block_until_ready(ref)

    assert out.shape == (batch, n_query, query_dim), out.shape
    max_err = float(jnp.max(jnp.abs(out - ref)))
    # Tolerance allows for the TPU default (bf16-pass) f32 matmul precision,
    # which both the kernel and the XLA reference use.
    assert jnp.allclose(out, ref, atol=1e-2, rtol=1e-2), max_err
    print("KERNEL_OK")
</pallas_src>

<mosaic_0001>
module attributes {stable_mosaic.version = 11 : i64} {
  func.func @_cross_attention_kernel(%arg0: i32, %arg1: i32, %arg2: i32, %arg3: memref<1x16x64xf32, #tpu.memory_space<vmem>>, %arg4: memref<1x32x32xf32, #tpu.memory_space<vmem>>, %arg5: memref<64x64xf32, #tpu.memory_space<vmem>>, %arg6: memref<32x64xf32, #tpu.memory_space<vmem>>, %arg7: memref<32x64xf32, #tpu.memory_space<vmem>>, %arg8: memref<64x128xf32, #tpu.memory_space<vmem>>, %arg9: memref<1x128xf32, #tpu.memory_space<vmem>>, %arg10: memref<1x16x128xf32, #tpu.memory_space<vmem>>, %arg11: memref<16x64xf32, #tpu.memory_space<vmem>>, %arg12: memref<16x64xf32, #tpu.memory_space<vmem>>, %arg13: memref<16x4xf32, #tpu.memory_space<vmem>>, %arg14: memref<16x4xf32, #tpu.memory_space<vmem>>) attributes {dimension_semantics = [#tpu.dimension_semantics<parallel>, #tpu.dimension_semantics<parallel>, #tpu.dimension_semantics<arbitrary>], iteration_bounds = array<i64: 2, 1, 1>, scalar_prefetch = 0 : i64, scratch_operands = 4 : i64, tpu.core_type = #tpu.core_type<tc>, window_params = [{transform_indices = @transform_0, window_bounds = array<i64: 1, 16, 64>}, {transform_indices = @transform_1, window_bounds = array<i64: 1, 32, 32>}, {pipeline_mode = #tpu.pipeline_mode<synchronous>, transform_indices = @transform_2, window_bounds = array<i64: 64, 64>}, {pipeline_mode = #tpu.pipeline_mode<synchronous>, transform_indices = @transform_3, window_bounds = array<i64: 32, 64>}, {pipeline_mode = #tpu.pipeline_mode<synchronous>, transform_indices = @transform_4, window_bounds = array<i64: 32, 64>}, {pipeline_mode = #tpu.pipeline_mode<synchronous>, transform_indices = @transform_5, window_bounds = array<i64: 64, 128>}, {pipeline_mode = #tpu.pipeline_mode<synchronous>, transform_indices = @transform_6, window_bounds = array<i64: 1, 128>}, {transform_indices = @transform_7, window_bounds = array<i64: 1, 16, 128>}]} {
    %c0_i32 = arith.constant 0 : i32
    %0 = arith.cmpi eq, %arg2, %c0_i32 : i32
    %1 = arith.extui %0 : i1 to i32
    %c0_i32_0 = arith.constant 0 : i32
    %2 = arith.cmpi ne, %1, %c0_i32_0 : i32
    scf.if %2 {
      %c0_70 = arith.constant 0 : index
      %c0_71 = arith.constant 0 : index
      %c0_72 = arith.constant 0 : index
      %117 = vector.load %arg3[%c0_70, %c0_71, %c0_72] : memref<1x16x64xf32, #tpu.memory_space<vmem>>, vector<1x16x64xf32>
      %118 = vector.shape_cast %117 : vector<1x16x64xf32> to vector<16x64xf32>
      %c0_73 = arith.constant 0 : index
      %c0_74 = arith.constant 0 : index
      %119 = vector.load %arg5[%c0_73, %c0_74] : memref<64x64xf32, #tpu.memory_space<vmem>>, vector<64x64xf32>
      %cst_75 = arith.constant dense<0.000000e+00> : vector<16x64xf32>
      %120 = tpu.matmul %118, %119, %cst_75 {dimension_numbers = #tpu.dot_dimension_numbers<[1], [0], [0], [1], [0, 0, 1, 1], [], []>} : vector<16x64xf32>, vector<64x64xf32>, vector<16x64xf32> -> vector<16x64xf32>
      %cst_76 = arith.constant 2.500000e-01 : f32
      %121 = vector.broadcast %cst_76 : f32 to vector<16x64xf32>
      %122 = arith.mulf %120, %121 : vector<16x64xf32>
      %c0_77 = arith.constant 0 : index
      %c0_78 = arith.constant 0 : index
      %123 = vector.load %arg11[%c0_77, %c0_78] : memref<16x64xf32, #tpu.memory_space<vmem>>, vector<16x64xf32>
      tpu.vector_store %arg11[%c0_77, %c0_78], %122 {strides = array<i32>} : memref<16x64xf32, #tpu.memory_space<vmem>>, vector<16x64xf32>,
      %cst_79 = arith.constant 0xFF800000 : f32
      %124 = vector.broadcast %cst_79 : f32 to vector<16x4xf32>
      %c0_80 = arith.constant 0 : index
      %c0_81 = arith.constant 0 : index
      %125 = vector.load %arg13[%c0_80, %c0_81] : memref<16x4xf32, #tpu.memory_space<vmem>>, vector<16x4xf32>
      tpu.vector_store %arg13[%c0_80, %c0_81], %124 {strides = array<i32>} : memref<16x4xf32, #tpu.memory_space<vmem>>, vector<16x4xf32>,
      %cst_82 = arith.constant 0.000000e+00 : f32
      %126 = vector.broadcast %cst_82 : f32 to vector<16x4xf32>
      %c0_83 = arith.constant 0 : index
      %c0_84 = arith.constant 0 : index
      %127 = vector.load %arg14[%c0_83, %c0_84] : memref<16x4xf32, #tpu.memory_space<vmem>>, vector<16x4xf32>
      tpu.vector_store %arg14[%c0_83, %c0_84], %126 {strides = array<i32>} : memref<16x4xf32, #tpu.memory_space<vmem>>, vector<16x4xf32>,
      %cst_85 = arith.constant 0.000000e+00 : f32
      %128 = vector.broadcast %cst_85 : f32 to vector<16x64xf32>
      %c0_86 = arith.constant 0 : index
      %c0_87 = arith.constant 0 : index
      %129 = vector.load %arg12[%c0_86, %c0_87] : memref<16x64xf32, #tpu.memory_space<vmem>>, vector<16x64xf32>
      tpu.vector_store %arg12[%c0_86, %c0_87], %128 {strides = array<i32>} : memref<16x64xf32, #tpu.memory_space<vmem>>, vector<16x64xf32>,
    } else {
    }
    %c0 = arith.constant 0 : index
    %c0_1 = arith.constant 0 : index
    %c0_2 = arith.constant 0 : index
    %3 = vector.load %arg4[%c0, %c0_1, %c0_2] : memref<1x32x32xf32, #tpu.memory_space<vmem>>, vector<1x32x32xf32>
    %4 = vector.shape_cast %3 : vector<1x32x32xf32> to vector<32x32xf32>
    %c0_3 = arith.constant 0 : index
    %c0_4 = arith.constant 0 : index
    %5 = vector.load %arg6[%c0_3, %c0_4] : memref<32x64xf32, #tpu.memory_space<vmem>>, vector<32x64xf32>
    %cst = arith.constant dense<0.000000e+00> : vector<32x64xf32>
    %6 = tpu.matmul %4, %5, %cst {dimension_numbers = #tpu.dot_dimension_numbers<[1], [0], [0], [1], [0, 0, 1, 1], [], []>} : vector<32x32xf32>, vector<32x64xf32>, vector<32x64xf32> -> vector<32x64xf32>
    %c0_5 = arith.constant 0 : index
    %c0_6 = arith.constant 0 : index
    %7 = vector.load %arg7[%c0_5, %c0_6] : memref<32x64xf32, #tpu.memory_space<vmem>>, vector<32x64xf32>
    %cst_7 = arith.constant dense<0.000000e+00> : vector<32x64xf32>
    %8 = tpu.matmul %4, %7, %cst_7 {dimension_numbers = #tpu.dot_dimension_numbers<[1], [0], [0], [1], [0, 0, 1, 1], [], []>} : vector<32x32xf32>, vector<32x64xf32>, vector<32x64xf32> -> vector<32x64xf32>
    %c0_8 = arith.constant 0 : index
    %c0_9 = arith.constant 0 : index
    %9 = vector.load %arg11[%c0_8, %c0_9] : memref<16x64xf32, #tpu.memory_space<vmem>>, vector<16x64xf32>
    %10 = vector.extract_strided_slice %9 {offsets = [0, 0], sizes = [16, 16], strides = [1, 1]} : vector<16x64xf32> to vector<16x16xf32>
    %11 = vector.extract_strided_slice %6 {offsets = [0, 0], sizes = [32, 16], strides = [1, 1]} : vector<32x64xf32> to vector<32x16xf32>
    %12 = vector.extract_strided_slice %8 {offsets = [0, 0], sizes = [32, 16], strides = [1, 1]} : vector<32x64xf32> to vector<32x16xf32>
    %cst_10 = arith.constant dense<0.000000e+00> : vector<16x32xf32>
    %13 = tpu.matmul %10, %11, %cst_10 {dimension_numbers = #tpu.dot_dimension_numbers<[1], [1], [0], [0], [0, 0, 1, 0], [], []>} : vector<16x16xf32>, vector<32x16xf32>, vector<16x32xf32> -> vector<16x32xf32>
    %c0_11 = arith.constant 0 : index
    %c0_12 = arith.constant 0 : index
    %14 = vector.load %arg13[%c0_11, %c0_12] : memref<16x4xf32, #tpu.memory_space<vmem>>, vector<16x1xf32>
    %cst_13 = arith.constant dense<0xFF800000> : vector<16xf32>
    %15 = vector.multi_reduction <maximumf>, %13, %cst_13 [1] : vector<16x32xf32> to vector<16xf32>
    %16 = vector.shape_cast %15 : vector<16xf32> to vector<16x1xf32>
    %17 = arith.maximumf %14, %16 : vector<16x1xf32>
    %18 = arith.subf %14, %17 : vector<16x1xf32>
    %19 = math.exp %18 : vector<16x1xf32>
    %20 = vector.broadcast %17 : vector<16x1xf32> to vector<16x32xf32>
    %21 = arith.subf %13, %20 : vector<16x32xf32>
    %22 = math.exp %21 : vector<16x32xf32>
    %c0_14 = arith.constant 0 : index
    %c0_15 = arith.constant 0 : index
    %23 = vector.load %arg14[%c0_14, %c0_15] : memref<16x4xf32, #tpu.memory_space<vmem>>, vector<16x1xf32>
    %24 = arith.mulf %19, %23 : vector<16x1xf32>
    %cst_16 = arith.constant dense<0.000000e+00> : vector<16xf32>
    %25 = vector.multi_reduction <add>, %22, %cst_16 [1] : vector<16x32xf32> to vector<16xf32>
    %26 = vector.shape_cast %25 : vector<16xf32> to vector<16x1xf32>
    %27 = arith.addf %24, %26 : vector<16x1xf32>
    %c0_17 = arith.constant 0 : index
    %c0_18 = arith.constant 0 : index
    %28 = vector.load %arg14[%c0_17, %c0_18] : memref<16x4xf32, #tpu.memory_space<vmem>>, vector<16x1xf32>
    tpu.vector_store %arg14[%c0_17, %c0_18], %27 {strides = array<i32>} : memref<16x4xf32, #tpu.memory_space<vmem>>, vector<16x1xf32>,
    %c0_19 = arith.constant 0 : index
    %c0_20 = arith.constant 0 : index
    %29 = vector.load %arg12[%c0_19, %c0_20] : memref<16x64xf32, #tpu.memory_space<vmem>>, vector<16x16xf32>
    %30 = vector.broadcast %19 : vector<16x1xf32> to vector<16x16xf32>
    %31 = arith.mulf %30, %29 : vector<16x16xf32>
    %cst_21 = arith.constant dense<0.000000e+00> : vector<16x16xf32>
    %32 = tpu.matmul %22, %12, %cst_21 {dimension_numbers = #tpu.dot_dimension_numbers<[1], [0], [0], [1], [0, 0, 1, 1], [], []>} : vector<16x32xf32>, vector<32x16xf32>, vector<16x16xf32> -> vector<16x16xf32>
    %33 = arith.addf %31, %32 : vector<16x16xf32>
    %c0_22 = arith.constant 0 : index
    %c0_23 = arith.constant 0 : index
    %34 = vector.load %arg12[%c0_22, %c0_23] : memref<16x64xf32, #tpu.memory_space<vmem>>, vector<16x16xf32>
    tpu.vector_store %arg12[%c0_22, %c0_23], %33 {strides = array<i32>} : memref<16x64xf32, #tpu.memory_space<vmem>>, vector<16x16xf32>,
    %c0_24 = arith.constant 0 : index
    %c0_25 = arith.constant 0 : index
    %35 = vector.load %arg13[%c0_24, %c0_25] : memref<16x4xf32, #tpu.memory_space<vmem>>, vector<16x1xf32>
    tpu.vector_store %arg13[%c0_24, %c0_25], %17 {strides = array<i32>} : memref<16x4xf32, #tpu.memory_space<vmem>>, vector<16x1xf32>,
    %36 = vector.extract_strided_slice %9 {offsets = [0, 16], sizes = [16, 16], strides = [1, 1]} : vector<16x64xf32> to vector<16x16xf32>
    %37 = vector.extract_strided_slice %6 {offsets = [0, 16], sizes = [32, 16], strides = [1, 1]} : vector<32x64xf32> to vector<32x16xf32>
    %38 = vector.extract_strided_slice %8 {offsets = [0, 16], sizes = [32, 16], strides = [1, 1]} : vector<32x64xf32> to vector<32x16xf32>
    %cst_26 = arith.constant dense<0.000000e+00> : vector<16x32xf32>
    %39 = tpu.matmul %36, %37, %cst_26 {dimension_numbers = #tpu.dot_dimension_numbers<[1], [1], [0], [0], [0, 0, 1, 0], [], []>} : vector<16x16xf32>, vector<32x16xf32>, vector<16x32xf32> -> vector<16x32xf32>
    %c0_27 = arith.constant 0 : index
    %c1 = arith.constant 1 : index
    %40 = vector.load %arg13[%c0_27, %c1] : memref<16x4xf32, #tpu.memory_space<vmem>>, vector<16x1xf32>
    %cst_28 = arith.constant dense<0xFF800000> : vector<16xf32>
    %41 = vector.multi_reduction <maximumf>, %39, %cst_28 [1] : vector<16x32xf32> to vector<16xf32>
    %42 = vector.shape_cast %41 : vector<16xf32> to vector<16x1xf32>
    %43 = arith.maximumf %40, %42 : vector<16x1xf32>
    %44 = arith.subf %40, %43 : vector<16x1xf32>
    %45 = math.exp %44 : vector<16x1xf32>
    %46 = vector.broadcast %43 : vector<16x1xf32> to vector<16x32xf32>
    %47 = arith.subf %39, %46 : vector<16x32xf32>
    %48 = math.exp %47 : vector<16x32xf32>
    %c0_29 = arith.constant 0 : index
    %c1_30 = arith.constant 1 : index
    %49 = vector.load %arg14[%c0_29, %c1_30] : memref<16x4xf32, #tpu.memory_space<vmem>>, vector<16x1xf32>
    %50 = arith.mulf %45, %49 : vector<16x1xf32>
    %cst_31 = arith.constant dense<0.000000e+00> : vector<16xf32>
    %51 = vector.multi_reduction <add>, %48, %cst_31 [1] : vector<16x32xf32> to vector<16xf32>
    %52 = vector.shape_cast %51 : vector<16xf32> to vector<16x1xf32>
    %53 = arith.addf %50, %52 : vector<16x1xf32>
    %c0_32 = arith.constant 0 : index
    %c1_33 = arith.constant 1 : index
    %54 = vector.load %arg14[%c0_32, %c1_33] : memref<16x4xf32, #tpu.memory_space<vmem>>, vector<16x1xf32>
    tpu.vector_store %arg14[%c0_32, %c1_33], %53 {strides = array<i32>} : memref<16x4xf32, #tpu.memory_space<vmem>>, vector<16x1xf32>,
    %c0_34 = arith.constant 0 : index
    %c16 = arith.constant 16 : index
    %55 = vector.load %arg12[%c0_34, %c16] : memref<16x64xf32, #tpu.memory_space<vmem>>, vector<16x16xf32>
    %56 = vector.broadcast %45 : vector<16x1xf32> to vector<16x16xf32>
    %57 = arith.mulf %56, %55 : vector<16x16xf32>
    %cst_35 = arith.constant dense<0.000000e+00> : vector<16x16xf32>
    %58 = tpu.matmul %48, %38, %cst_35 {dimension_numbers = #tpu.dot_dimension_numbers<[1], [0], [0], [1], [0, 0, 1, 1], [], []>} : vector<16x32xf32>, vector<32x16xf32>, vector<16x16xf32> -> vector<16x16xf32>
    %59 = arith.addf %57, %58 : vector<16x16xf32>
    %c0_36 = arith.constant 0 : index
    %c16_37 = arith.constant 16 : index
    %60 = vector.load %arg12[%c0_36, %c16_37] : memref<16x64xf32, #tpu.memory_space<vmem>>, vector<16x16xf32>
    tpu.vector_store %arg12[%c0_36, %c16_37], %59 {strides = array<i32>} : memref<16x64xf32, #tpu.memory_space<vmem>>, vector<16x16xf32>,
    %c0_38 = arith.constant 0 : index
    %c1_39 = arith.constant 1 : index
    %61 = vector.load %arg13[%c0_38, %c1_39] : memref<16x4xf32, #tpu.memory_space<vmem>>, vector<16x1xf32>
    tpu.vector_store %arg13[%c0_38, %c1_39], %43 {strides = array<i32>} : memref<16x4xf32, #tpu.memory_space<vmem>>, vector<16x1xf32>,
    %62 = vector.extract_strided_slice %9 {offsets = [0, 32], sizes = [16, 16], strides = [1, 1]} : vector<16x64xf32> to vector<16x16xf32>
    %63 = vector.extract_strided_slice %6 {offsets = [0, 32], sizes = [32, 16], strides = [1, 1]} : vector<32x64xf32> to vector<32x16xf32>
    %64 = vector.extract_strided_slice %8 {offsets = [0, 32], sizes = [32, 16], strides = [1, 1]} : vector<32x64xf32> to vector<32x16xf32>
    %cst_40 = arith.constant dense<0.000000e+00> : vector<16x32xf32>
    %65 = tpu.matmul %62, %63, %cst_40 {dimension_numbers = #tpu.dot_dimension_numbers<[1], [1], [0], [0], [0, 0, 1, 0], [], []>} : vector<16x16xf32>, vector<32x16xf32>, vector<16x32xf32> -> vector<16x32xf32>
    %c0_41 = arith.constant 0 : index
    %c2 = arith.constant 2 : index
    %66 = vector.load %arg13[%c0_41, %c2] : memref<16x4xf32, #tpu.memory_space<vmem>>, vector<16x1xf32>
    %cst_42 = arith.constant dense<0xFF800000> : vector<16xf32>
    %67 = vector.multi_reduction <maximumf>, %65, %cst_42 [1] : vector<16x32xf32> to vector<16xf32>
    %68 = vector.shape_cast %67 : vector<16xf32> to vector<16x1xf32>
    %69 = arith.maximumf %66, %68 : vector<16x1xf32>
    %70 = arith.subf %66, %69 : vector<16x1xf32>
    %71 = math.exp %70 : vector<16x1xf32>
    %72 = vector.broadcast %69 : vector<16x1xf32> to vector<16x32xf32>
    %73 = arith.subf %65, %72 : vector<16x32xf32>
    %74 = math.exp %73 : vector<16x32xf32>
    %c0_43 = arith.constant 0 : index
    %c2_44 = arith.constant 2 : index
    %75 = vector.load %arg14[%c0_43, %c2_44] : memref<16x4xf32, #tpu.memory_space<vmem>>, vector<16x1xf32>
    %76 = arith.mulf %71, %75 : vector<16x1xf32>
    %cst_45 = arith.constant dense<0.000000e+00> : vector<16xf32>
    %77 = vector.multi_reduction <add>, %74, %cst_45 [1] : vector<16x32xf32> to vector<16xf32>
    %78 = vector.shape_cast %77 : vector<16xf32> to vector<16x1xf32>
    %79 = arith.addf %76, %78 : vector<16x1xf32>
    %c0_46 = arith.constant 0 : index
    %c2_47 = arith.constant 2 : index
    %80 = vector.load %arg14[%c0_46, %c2_47] : memref<16x4xf32, #tpu.memory_space<vmem>>, vector<16x1xf32>
    tpu.vector_store %arg14[%c0_46, %c2_47], %79 {strides = array<i32>} : memref<16x4xf32, #tpu.memory_space<vmem>>, vector<16x1xf32>,
    %c0_48 = arith.constant 0 : index
    %c32 = arith.constant 32 : index
    %81 = vector.load %arg12[%c0_48, %c32] : memref<16x64xf32, #tpu.memory_space<vmem>>, vector<16x16xf32>
    %82 = vector.broadcast %71 : vector<16x1xf32> to vector<16x16xf32>
    %83 = arith.mulf %82, %81 : vector<16x16xf32>
    %cst_49 = arith.constant dense<0.000000e+00> : vector<16x16xf32>
    %84 = tpu.matmul %74, %64, %cst_49 {dimension_numbers = #tpu.dot_dimension_numbers<[1], [0], [0], [1], [0, 0, 1, 1], [], []>} : vector<16x32xf32>, vector<32x16xf32>, vector<16x16xf32> -> vector<16x16xf32>
    %85 = arith.addf %83, %84 : vector<16x16xf32>
    %c0_50 = arith.constant 0 : index
    %c32_51 = arith.constant 32 : index
    %86 = vector.load %arg12[%c0_50, %c32_51] : memref<16x64xf32, #tpu.memory_space<vmem>>, vector<16x16xf32>
    tpu.vector_store %arg12[%c0_50, %c32_51], %85 {strides = array<i32>} : memref<16x64xf32, #tpu.memory_space<vmem>>, vector<16x16xf32>,
    %c0_52 = arith.constant 0 : index
    %c2_53 = arith.constant 2 : index
    %87 = vector.load %arg13[%c0_52, %c2_53] : memref<16x4xf32, #tpu.memory_space<vmem>>, vector<16x1xf32>
    tpu.vector_store %arg13[%c0_52, %c2_53], %69 {strides = array<i32>} : memref<16x4xf32, #tpu.memory_space<vmem>>, vector<16x1xf32>,
    %88 = vector.extract_strided_slice %9 {offsets = [0, 48], sizes = [16, 16], strides = [1, 1]} : vector<16x64xf32> to vector<16x16xf32>
    %89 = vector.extract_strided_slice %6 {offsets = [0, 48], sizes = [32, 16], strides = [1, 1]} : vector<32x64xf32> to vector<32x16xf32>
    %90 = vector.extract_strided_slice %8 {offsets = [0, 48], sizes = [32, 16], strides = [1, 1]} : vector<32x64xf32> to vector<32x16xf32>
    %cst_54 = arith.constant dense<0.000000e+00> : vector<16x32xf32>
    %91 = tpu.matmul %88, %89, %cst_54 {dimension_numbers = #tpu.dot_dimension_numbers<[1], [1], [0], [0], [0, 0, 1, 0], [], []>} : vector<16x16xf32>, vector<32x16xf32>, vector<16x32xf32> -> vector<16x32xf32>
    %c0_55 = arith.constant 0 : index
    %c3 = arith.constant 3 : index
    %92 = vector.load %arg13[%c0_55, %c3] : memref<16x4xf32, #tpu.memory_space<vmem>>, vector<16x1xf32>
    %cst_56 = arith.constant dense<0xFF800000> : vector<16xf32>
    %93 = vector.multi_reduction <maximumf>, %91, %cst_56 [1] : vector<16x32xf32> to vector<16xf32>
    %94 = vector.shape_cast %93 : vector<16xf32> to vector<16x1xf32>
    %95 = arith.maximumf %92, %94 : vector<16x1xf32>
    %96 = arith.subf %92, %95 : vector<16x1xf32>
    %97 = math.exp %96 : vector<16x1xf32>
    %98 = vector.broadcast %95 : vector<16x1xf32> to vector<16x32xf32>
    %99 = arith.subf %91, %98 : vector<16x32xf32>
    %100 = math.exp %99 : vector<16x32xf32>
    %c0_57 = arith.constant 0 : index
    %c3_58 = arith.constant 3 : index
    %101 = vector.load %arg14[%c0_57, %c3_58] : memref<16x4xf32, #tpu.memory_space<vmem>>, vector<16x1xf32>
    %102 = arith.mulf %97, %101 : vector<16x1xf32>
    %cst_59 = arith.constant dense<0.000000e+00> : vector<16xf32>
    %103 = vector.multi_reduction <add>, %100, %cst_59 [1] : vector<16x32xf32> to vector<16xf32>
    %104 = vector.shape_cast %103 : vector<16xf32> to vector<16x1xf32>
    %105 = arith.addf %102, %104 : vector<16x1xf32>
    %c0_60 = arith.constant 0 : index
    %c3_61 = arith.constant 3 : index
    %106 = vector.load %arg14[%c0_60, %c3_61] : memref<16x4xf32, #tpu.memory_space<vmem>>, vector<16x1xf32>
    tpu.vector_store %arg14[%c0_60, %c3_61], %105 {strides = array<i32>} : memref<16x4xf32, #tpu.memory_space<vmem>>, vector<16x1xf32>,
    %c0_62 = arith.constant 0 : index
    %c48 = arith.constant 48 : index
    %107 = vector.load %arg12[%c0_62, %c48] : memref<16x64xf32, #tpu.memory_space<vmem>>, vector<16x16xf32>
    %108 = vector.broadcast %97 : vector<16x1xf32> to vector<16x16xf32>
    %109 = arith.mulf %108, %107 : vector<16x16xf32>
    %cst_63 = arith.constant dense<0.000000e+00> : vector<16x16xf32>
    %110 = tpu.matmul %100, %90, %cst_63 {dimension_numbers = #tpu.dot_dimension_numbers<[1], [0], [0], [1], [0, 0, 1, 1], [], []>} : vector<16x32xf32>, vector<32x16xf32>, vector<16x16xf32> -> vector<16x16xf32>
    %111 = arith.addf %109, %110 : vector<16x16xf32>
    %c0_64 = arith.constant 0 : index
    %c48_65 = arith.constant 48 : index
    %112 = vector.load %arg12[%c0_64, %c48_65] : memref<16x64xf32, #tpu.memory_space<vmem>>, vector<16x16xf32>
    tpu.vector_store %arg12[%c0_64, %c48_65], %111 {strides = array<i32>} : memref<16x64xf32, #tpu.memory_space<vmem>>, vector<16x16xf32>,
    %c0_66 = arith.constant 0 : index
    %c3_67 = arith.constant 3 : index
    %113 = vector.load %arg13[%c0_66, %c3_67] : memref<16x4xf32, #tpu.memory_space<vmem>>, vector<16x1xf32>
    tpu.vector_store %arg13[%c0_66, %c3_67], %95 {strides = array<i32>} : memref<16x4xf32, #tpu.memory_space<vmem>>, vector<16x1xf32>,
    %c0_i32_68 = arith.constant 0 : i32
    %114 = arith.cmpi eq, %arg2, %c0_i32_68 : i32
    %115 = arith.extui %114 : i1 to i32
    %c0_i32_69 = arith.constant 0 : i32
    %116 = arith.cmpi ne, %115, %c0_i32_69 : i32
    scf.if %116 {
      %c0_70 = arith.constant 0 : index
      %c0_71 = arith.constant 0 : index
      %117 = vector.load %arg14[%c0_70, %c0_71] : memref<16x4xf32, #tpu.memory_space<vmem>>, vector<16x4xf32>
      %cst_72 = arith.constant 1.000000e+00 : f32
      %118 = vector.broadcast %cst_72 : f32 to vector<16x4xf32>
      %119 = arith.divf %118, %117 : vector<16x4xf32>
      %c0_73 = arith.constant 0 : index
      %c0_74 = arith.constant 0 : index
      %120 = vector.load %arg12[%c0_73, %c0_74] : memref<16x64xf32, #tpu.memory_space<vmem>>, vector<16x16xf32>
      %121 = vector.extract_strided_slice %119 {offsets = [0, 0], sizes = [16, 1], strides = [1, 1]} : vector<16x4xf32> to vector<16x1xf32>
      %122 = vector.broadcast %121 : vector<16x1xf32> to vector<16x16xf32>
      %123 = arith.mulf %120, %122 : vector<16x16xf32>
      %c0_75 = arith.constant 0 : index
      %c0_76 = arith.constant 0 : index
      %124 = vector.load %arg12[%c0_75, %c0_76] : memref<16x64xf32, #tpu.memory_space<vmem>>, vector<16x16xf32>
      tpu.vector_store %arg12[%c0_75, %c0_76], %123 {strides = array<i32>} : memref<16x64xf32, #tpu.memory_space<vmem>>, vector<16x16xf32>,
      %c0_77 = arith.constant 0 : index
      %c16_78 = arith.constant 16 : index
      %125 = vector.load %arg12[%c0_77, %c16_78] : memref<16x64xf32, #tpu.memory_space<vmem>>, vector<16x16xf32>
      %126 = vector.extract_strided_slice %119 {offsets = [0, 1], sizes = [16, 1], strides = [1, 1]} : vector<16x4xf32> to vector<16x1xf32>
      %127 = vector.broadcast %126 : vector<16x1xf32> to vector<16x16xf32>
      %128 = arith.mulf %125, %127 : vector<16x16xf32>
      %c0_79 = arith.constant 0 : index
      %c16_80 = arith.constant 16 : index
      %129 = vector.load %arg12[%c0_79, %c16_80] : memref<16x64xf32, #tpu.memory_space<vmem>>, vector<16x16xf32>
      tpu.vector_store %arg12[%c0_79, %c16_80], %128 {strides = array<i32>} : memref<16x64xf32, #tpu.memory_space<vmem>>, vector<16x16xf32>,
      %c0_81 = arith.constant 0 : index
      %c32_82 = arith.constant 32 : index
      %130 = vector.load %arg12[%c0_81, %c32_82] : memref<16x64xf32, #tpu.memory_space<vmem>>, vector<16x16xf32>
      %131 = vector.extract_strided_slice %119 {offsets = [0, 2], sizes = [16, 1], strides = [1, 1]} : vector<16x4xf32> to vector<16x1xf32>
      %132 = vector.broadcast %131 : vector<16x1xf32> to vector<16x16xf32>
      %133 = arith.mulf %130, %132 : vector<16x16xf32>
      %c0_83 = arith.constant 0 : index
      %c32_84 = arith.constant 32 : index
      %134 = vector.load %arg12[%c0_83, %c32_84] : memref<16x64xf32, #tpu.memory_space<vmem>>, vector<16x16xf32>
      tpu.vector_store %arg12[%c0_83, %c32_84], %133 {strides = array<i32>} : memref<16x64xf32, #tpu.memory_space<vmem>>, vector<16x16xf32>,
      %c0_85 = arith.constant 0 : index
      %c48_86 = arith.constant 48 : index
      %135 = vector.load %arg12[%c0_85, %c48_86] : memref<16x64xf32, #tpu.memory_space<vmem>>, vector<16x16xf32>
      %136 = vector.extract_strided_slice %119 {offsets = [0, 3], sizes = [16, 1], strides = [1, 1]} : vector<16x4xf32> to vector<16x1xf32>
      %137 = vector.broadcast %136 : vector<16x1xf32> to vector<16x16xf32>
      %138 = arith.mulf %135, %137 : vector<16x16xf32>
      %c0_87 = arith.constant 0 : index
      %c48_88 = arith.constant 48 : index
      %139 = vector.load %arg12[%c0_87, %c48_88] : memref<16x64xf32, #tpu.memory_space<vmem>>, vector<16x16xf32>
      tpu.vector_store %arg12[%c0_87, %c48_88], %138 {strides = array<i32>} : memref<16x64xf32, #tpu.memory_space<vmem>>, vector<16x16xf32>,
      %c0_89 = arith.constant 0 : index
      %c0_90 = arith.constant 0 : index
      %140 = vector.load %arg12[%c0_89, %c0_90] : memref<16x64xf32, #tpu.memory_space<vmem>>, vector<16x64xf32>
      %c0_91 = arith.constant 0 : index
      %c0_92 = arith.constant 0 : index
      %141 = vector.load %arg8[%c0_91, %c0_92] : memref<64x128xf32, #tpu.memory_space<vmem>>, vector<64x128xf32>
      %cst_93 = arith.constant dense<0.000000e+00> : vector<16x128xf32>
      %142 = tpu.matmul %140, %141, %cst_93 {dimension_numbers = #tpu.dot_dimension_numbers<[1], [0], [0], [1], [0, 0, 1, 1], [], []>} : vector<16x64xf32>, vector<64x128xf32>, vector<16x128xf32> -> vector<16x128xf32>
      %c0_94 = arith.constant 0 : index
      %c0_95 = arith.constant 0 : index
      %143 = vector.load %arg9[%c0_94, %c0_95] : memref<1x128xf32, #tpu.memory_space<vmem>>, vector<1x128xf32>
      %144 = vector.broadcast %143 : vector<1x128xf32> to vector<16x128xf32>
      %145 = arith.addf %142, %144 : vector<16x128xf32>
      %146 = vector.shape_cast %145 : vector<16x128xf32> to vector<1x16x128xf32>
      %c0_96 = arith.constant 0 : index
      %c0_97 = arith.constant 0 : index
      %c0_98 = arith.constant 0 : index
      %147 = vector.load %arg10[%c0_96, %c0_97, %c0_98] : memref<1x16x128xf32, #tpu.memory_space<vmem>>, vector<1x16x128xf32>
      tpu.vector_store %arg10[%c0_96, %c0_97, %c0_98], %146 {strides = array<i32>} : memref<1x16x128xf32, #tpu.memory_space<vmem>>, vector<1x16x128xf32>,
    } else {
    }
    return
  }
  func.func @transform_0(%arg0: i32, %arg1: i32, %arg2: i32) -> (i32, i32, i32) {
    %c0_i32 = arith.constant 0 : i32
    %c0_i32_0 = arith.constant 0 : i32
    return %arg0, %arg1, %c0_i32 : i32, i32, i32
  }
  func.func @transform_1(%arg0: i32, %arg1: i32, %arg2: i32) -> (i32, i32, i32) {
    %c0_i32 = arith.constant 0 : i32
    %c0_i32_0 = arith.constant 0 : i32
    return %arg0, %c0_i32, %arg2 : i32, i32, i32
  }
  func.func @transform_2(%arg0: i32, %arg1: i32, %arg2: i32) -> (i32, i32) {
    %c0_i32 = arith.constant 0 : i32
    %c0_i32_0 = arith.constant 0 : i32
    %c0_i32_1 = arith.constant 0 : i32
    return %c0_i32, %c0_i32_0 : i32, i32
  }
  func.func @transform_3(%arg0: i32, %arg1: i32, %arg2: i32) -> (i32, i32) {
    %c0_i32 = arith.constant 0 : i32
    %c0_i32_0 = arith.constant 0 : i32
    %c0_i32_1 = arith.constant 0 : i32
    return %c0_i32, %c0_i32_0 : i32, i32
  }
  func.func @transform_4(%arg0: i32, %arg1: i32, %arg2: i32) -> (i32, i32) {
    %c0_i32 = arith.constant 0 : i32
    %c0_i32_0 = arith.constant 0 : i32
    %c0_i32_1 = arith.constant 0 : i32
    return %c0_i32, %c0_i32_0 : i32, i32
  }
  func.func @transform_5(%arg0: i32, %arg1: i32, %arg2: i32) -> (i32, i32) {
    %c0_i32 = arith.constant 0 : i32
    %c0_i32_0 = arith.constant 0 : i32
    %c0_i32_1 = arith.constant 0 : i32
    return %c0_i32, %c0_i32_0 : i32, i32
  }
  func.func @transform_6(%arg0: i32, %arg1: i32, %arg2: i32) -> (i32, i32) {
    %c0_i32 = arith.constant 0 : i32
    %c0_i32_0 = arith.constant 0 : i32
    %c0_i32_1 = arith.constant 0 : i32
    return %c0_i32, %c0_i32_0 : i32, i32
  }
  func.func @transform_7(%arg0: i32, %arg1: i32, %arg2: i32) -> (i32, i32, i32) {
    %c0_i32 = arith.constant 0 : i32
    %c0_i32_0 = arith.constant 0 : i32
    return %arg0, %arg1, %c0_i32 : i32, i32, i32
  }
}

</mosaic_0001>

<llo_original>
// kernel: tpu_custom_call.1
$region0: #{tpu_custom_call.1}
  #allocation0 [shape = 'u32[]', space=smem, size = 0x4, offset = 0x4, fixed_abs, tag = 'smem constant byte address 0x4 - core index']
  #allocation1 [shape = 'u32[144,128]{1,0:T(1,128)}', space=vmem, size = 0x12000, scoped, tag = 'internal scratch']
  #allocation2 [shape = 'f32[16,64]{1,0:T(8,128)}', space=vmem, size = 0x2000, scoped, tag = 'scratch operand']
  #allocation3 [shape = 'f32[16,64]{1,0:T(8,128)}', space=vmem, size = 0x2000, scoped, tag = 'scratch operand']
  #allocation4 [shape = 'f32[16,4]{1,0:T(8,128)}', space=vmem, size = 0x2000, scoped, tag = 'scratch operand']
  #allocation5 [shape = 'f32[16,4]{1,0:T(8,128)}', space=vmem, size = 0x2000, scoped, tag = 'scratch operand']
  %s0 = inlined_call_operand.hbm [shape: f32[2,16,64], index: 0, kind: input, shape index: {}]
  %s1 = inlined_call_operand.hbm [shape: f32[2,32,32], index: 1, kind: input, shape index: {}]
  %s2 = inlined_call_operand.hbm [shape: f32[64,64], index: 2, kind: input, shape index: {}]
  %s3 = inlined_call_operand.hbm [shape: f32[32,64], index: 3, kind: input, shape index: {}]
  %s4 = inlined_call_operand.hbm [shape: f32[32,64], index: 4, kind: input, shape index: {}]
  %s5 = inlined_call_operand.hbm [shape: f32[64,128], index: 5, kind: input, shape index: {}]
  %s6 = inlined_call_operand.vmem [shape: f32[1,128], index: 6, kind: input, shape index: {}]
  %s7 = inlined_call_operand.hbm [shape: f32[2,16,128], index: 7, kind: output, shape index: {}]
  %s8 = sld [smem:[#allocation0]]
  $region93: #{tpu_custom_call.1} parent=0
    _
  %s10 = ssub.s32 1, %s8
  %s11 = scalar_select 0, %s10, %s8
  $region1: #{tpu_custom_call.1} parent=0
    #allocation6 [shape = 'u8[16384]{0}', space=vmem, size = 0x4000, scoped, tag = 'input window, operand 0']
    #allocation7 [shape = 's32[2]{0}', space=sflag, size = 0x8, scoped, tag = 'scoped memory for tpu_custom_call.1']
    #allocation8 [shape = 's32[2]{0}', space=sflag, size = 0x8, scoped, tag = 'scoped memory for tpu_custom_call.1']
    #allocation9 [shape = 'u8[32768]{0}', space=vmem, size = 0x8000, scoped, tag = 'input window, operand 1']
    #allocation10 [shape = 's32[2]{0}', space=sflag, size = 0x8, scoped, tag = 'scoped memory for tpu_custom_call.1']
    #allocation11 [shape = 'u8[32768]{0}', space=vmem, size = 0x8000, scoped, tag = 'input window, operand 2, single buffered']
    #allocation12 [shape = 'u8[16384]{0}', space=vmem, size = 0x4000, scoped, tag = 'input window, operand 3, single buffered']
    #allocation13 [shape = 's32[1]{0}', space=sflag, size = 0x4, scoped, tag = 'scoped memory for tpu_custom_call.1']
    #allocation14 [shape = 'u8[16384]{0}', space=vmem, size = 0x4000, scoped, tag = 'input window, operand 4, single buffered']
    #allocation15 [shape = 'u8[32768]{0}', space=vmem, size = 0x8000, scoped, tag = 'input window, operand 5, single buffered']
    #allocation16 [shape = 's32[1]{0}', space=sflag, size = 0x4, scoped, tag = 'scoped memory for tpu_custom_call.1']
    #allocation17 [shape = 'u8[16384]{0}', space=vmem, size = 0x4000, scoped, tag = 'output window, operand 0']
    %12 = vsyncpa [#allocation7], 0
    %s13 = scalar_lea.sflag [#allocation7], 1
    %14 = vsyncpa %s13, 0
    %15 = vsyncpa [#allocation10], 0
    %s16 = scalar_lea.sflag [#allocation10], 1
    %17 = vsyncpa %s16, 0
    %18 = vsyncpa [#allocation13], 0
    %19 = vsyncpa [#allocation16], 0
    %20 = vsyncpa [#allocation8], 0
    %s21 = scalar_lea.sflag [#allocation8], 1
    %22 = vsyncpa %s21, 0
    loop: start=0, step=1, limit=4
    $region2: #{tpu_custom_call.1} parent=1 // loop_pre_header
      _
    $region3: #{tpu_custom_call.1} parent=1 // loop_header
      %s24 = sphi 0, %s28
      %p25 = scmp.ge.s32.totalorder %s24, 4
      %s31 = sphi 0, %s50
      %s32 = sphi 0, %s46
      %s33 = sphi 0, %s42
      %s34 = sphi 0, %s31
      %s35 = sphi 0, %s32
      %s36 = sphi 0, %s33
      %s37 = sphi 0, %s34
      %s38 = sphi 0, %s35
      %s39 = sphi 0, %s36
      %s55 = sphi 0, %s57
      %s58 = sphi 0, %s55
      %s59 = sphi 0, %s58
      %s75 = sphi 0, %s59
      %s83 = sphi 0, %s85
      %s86 = sphi 0, %s83
      %s87 = sphi 0, %s86
      %s103 = sphi 0, %s87
      %s107 = sphi 0, %s107
      %s109 = sphi 0, %s107
      %s110 = sphi 0, %s109
      %s124 = sphi 0, %s110
      %s128 = sphi 0, %s128
      %s130 = sphi 0, %s128
      %s131 = sphi 0, %s130
      %s145 = sphi 0, %s131
      %s149 = sphi 0, %s149
      %s151 = sphi 0, %s149
      %s152 = sphi 0, %s151
      %s166 = sphi 0, %s152
      %s170 = sphi 0, %s170
      %s172 = sphi 0, %s170
      %s173 = sphi 0, %s172
      %s187 = sphi 0, %s173
      %s191 = sphi 0, %s191
      %s193 = sphi 0, %s191
      %s194 = sphi 0, %s193
      %s208 = sphi 0, %s194
      %s216 = sphi 0, %s218
      %s219 = sphi 0, %s216
      %s220 = sphi 0, %s219
      %s236 = sphi 0, %s220
    $region4: #{tpu_custom_call.1} parent=1 // loop_header_branch
      %27 = sbr.rel (%p25) target = $region8
    $region5: #{tpu_custom_call.1} parent=1 // loop_body
      %s29 = ssub.s32 %s24, 1
      %s30 = ssub.s32 %s24, 2
      %s40 = sadd.s32 1, %s33
      %p41 = scmp.ge.s32.totalorder %s40, 1
      %s42 = scalar_select %p41, 0, %s40
      %s43 = sadd.s32 1, %s32
      %s44 = scalar_select %p41, %s43, %s32
      %p45 = scmp.ge.s32.totalorder %s44, 1
      %s46 = scalar_select %p45, 0, %s44
      %s47 = sadd.s32 1, %s31
      %s48 = scalar_select %p45, %s47, %s31
      %p49 = scmp.ge.s32.totalorder %s48, 2
      %s50 = scalar_select %p49, 0, %s48
      %s51 = ssub.s32 %s31, %s50
      %s52 = ssub.s32 %s32, %s46
      %s53 = sor.u32 %s51, %s52
      %p54 = scmp.eq.s32.totalorder %s53, 0
      %s56 = sadd.s32 %s55, 1
      %s57 = scalar_select %p54, %s55, %s56
      %p60 = pneg %p54
      %p61 = scmp.eq.s32.totalorder %s24, 1
      %p62 = por %p60, %p61
      %p63 = scmp.ne.s32.totalorder %s55, %s58
      %p64 = scmp.eq.s32.totalorder %s24, 0
      %p65 = por %p63, %p64
      %p66 = scmp.ne.s32.totalorder %s55, %s58
      %p67 = scmp.eq.s32.totalorder %s29, 1
      %p68 = por %p66, %p67
      %p69 = scmp.ne.s32.totalorder %s58, %s59
      %p70 = scmp.eq.s32.totalorder %s29, 0
      %p71 = por %p69, %p70
      %p72 = scmp.ne.s32.totalorder %s58, %s59
      %p73 = scmp.eq.s32.totalorder %s30, 1
      %p74 = por %p72, %p73
      %p76 = scmp.ne.s32.totalorder %s59, %s75
      %p77 = scmp.eq.s32.totalorder %s30, 0
      %p78 = por %p76, %p77
      %s79 = ssub.s32 %s31, %s50
      %s80 = ssub.s32 %s33, %s42
      %s81 = sor.u32 %s79, %s80
      %p82 = scmp.eq.s32.totalorder %s81, 0
      %s84 = sadd.s32 %s83, 1
      %s85 = scalar_select %p82, %s83, %s84
      %p88 = pneg %p82
      %p89 = scmp.eq.s32.totalorder %s24, 1
      %p90 = por %p88, %p89
      %p91 = scmp.ne.s32.totalorder %s83, %s86
      %p92 = scmp.eq.s32.totalorder %s24, 0
      %p93 = por %p91, %p92
      %p94 = scmp.ne.s32.totalorder %s83, %s86
      %p95 = scmp.eq.s32.totalorder %s29, 1
      %p96 = por %p94, %p95
      %p97 = scmp.ne.s32.totalorder %s86, %s87
      %p98 = scmp.eq.s32.totalorder %s29, 0
      %p99 = por %p97, %p98
      %p100 = scmp.ne.s32.totalorder %s86, %s87
      %p101 = scmp.eq.s32.totalorder %s30, 1
      %p102 = por %p100, %p101
      %p104 = scmp.ne.s32.totalorder %s87, %s103
      %p105 = scmp.eq.s32.totalorder %s30, 0
      %p106 = por %p104, %p105
      %s108 = sadd.s32 %s107, 1
      %p111 = scmp.eq.s32.totalorder %s24, 1
      %p112 = scmp.ne.s32.totalorder %s107, %s109
      %p113 = scmp.eq.s32.totalorder %s24, 0
      %p114 = por %p112, %p113
      %p115 = scmp.ne.s32.totalorder %s107, %s109
      %p116 = scmp.eq.s32.totalorder %s29, 1
      %p117 = por %p115, %p116
      %p118 = scmp.ne.s32.totalorder %s109, %s110
      %p119 = scmp.eq.s32.totalorder %s29, 0
      %p120 = por %p118, %p119
      %p121 = scmp.ne.s32.totalorder %s109, %s110
      %p122 = scmp.eq.s32.totalorder %s30, 1
      %p123 = por %p121, %p122
      %p125 = scmp.ne.s32.totalorder %s110, %s124
      %p126 = scmp.eq.s32.totalorder %s30, 0
      %p127 = por %p125, %p126
      %s129 = sadd.s32 %s128, 1
      %p132 = scmp.eq.s32.totalorder %s24, 1
      %p133 = scmp.ne.s32.totalorder %s128, %s130
      %p134 = scmp.eq.s32.totalorder %s24, 0
      %p135 = por %p133, %p134
      %p136 = scmp.ne.s32.totalorder %s128, %s130
      %p137 = scmp.eq.s32.totalorder %s29, 1
      %p138 = por %p136, %p137
      %p139 = scmp.ne.s32.totalorder %s130, %s131
      %p140 = scmp.eq.s32.totalorder %s29, 0
      %p141 = por %p139, %p140
      %p142 = scmp.ne.s32.totalorder %s130, %s131
      %p143 = scmp.eq.s32.totalorder %s30, 1
      %p144 = por %p142, %p143
      %p146 = scmp.ne.s32.totalorder %s131, %s145
      %p147 = scmp.eq.s32.totalorder %s30, 0
      %p148 = por %p146, %p147
      %s150 = sadd.s32 %s149, 1
      %p153 = scmp.eq.s32.totalorder %s24, 1
      %p154 = scmp.ne.s32.totalorder %s149, %s151
      %p155 = scmp.eq.s32.totalorder %s24, 0
      %p156 = por %p154, %p155
      %p157 = scmp.ne.s32.totalorder %s149, %s151
      %p158 = scmp.eq.s32.totalorder %s29, 1
      %p159 = por %p157, %p158
      %p160 = scmp.ne.s32.totalorder %s151, %s152
      %p161 = scmp.eq.s32.totalorder %s29, 0
      %p162 = por %p160, %p161
      %p163 = scmp.ne.s32.totalorder %s151, %s152
      %p164 = scmp.eq.s32.totalorder %s30, 1
      %p165 = por %p163, %p164
      %p167 = scmp.ne.s32.totalorder %s152, %s166
      %p168 = scmp.eq.s32.totalorder %s30, 0
      %p169 = por %p167, %p168
      %s171 = sadd.s32 %s170, 1
      %p174 = scmp.eq.s32.totalorder %s24, 1
      %p175 = scmp.ne.s32.totalorder %s170, %s172
      %p176 = scmp.eq.s32.totalorder %s24, 0
      %p177 = por %p175, %p176
      %p178 = scmp.ne.s32.totalorder %s170, %s172
      %p179 = scmp.eq.s32.totalorder %s29, 1
      %p180 = por %p178, %p179
      %p181 = scmp.ne.s32.totalorder %s172, %s173
      %p182 = scmp.eq.s32.totalorder %s29, 0
      %p183 = por %p181, %p182
      %p184 = scmp.ne.s32.totalorder %s172, %s173
      %p185 = scmp.eq.s32.totalorder %s30, 1
      %p186 = por %p184, %p185
      %p188 = scmp.ne.s32.totalorder %s173, %s187
      %p189 = scmp.eq.s32.totalorder %s30, 0
      %p190 = por %p188, %p189
      %s192 = sadd.s32 %s191, 1
      %p195 = scmp.eq.s32.totalorder %s24, 1
      %p196 = scmp.ne.s32.totalorder %s191, %s193
      %p197 = scmp.eq.s32.totalorder %s24, 0
      %p198 = por %p196, %p197
      %p199 = scmp.ne.s32.totalorder %s191, %s193
      %p200 = scmp.eq.s32.totalorder %s29, 1
      %p201 = por %p199, %p200
      %p202 = scmp.ne.s32.totalorder %s193, %s194
      %p203 = scmp.eq.s32.totalorder %s29, 0
      %p204 = por %p202, %p203
      %p205 = scmp.ne.s32.totalorder %s193, %s194
      %p206 = scmp.eq.s32.totalorder %s30, 1
      %p207 = por %p205, %p206
      %p209 = scmp.ne.s32.totalorder %s194, %s208
      %p210 = scmp.eq.s32.totalorder %s30, 0
      %p211 = por %p209, %p210
      %s212 = ssub.s32 %s31, %s50
      %s213 = ssub.s32 %s32, %s46
      %s214 = sor.u32 %s212, %s213
      %p215 = scmp.eq.s32.totalorder %s214, 0
      %s217 = sadd.s32 %s216, 1
      %s218 = scalar_select %p215, %s216, %s217
      %p221 = pneg %p215
      %p222 = scmp.eq.s32.totalorder %s24, 1
      %p223 = por %p221, %p222
      %p224 = scmp.ne.s32.totalorder %s216, %s219
      %p225 = scmp.eq.s32.totalorder %s24, 0
      %p226 = por %p224, %p225
      %p227 = scmp.ne.s32.totalorder %s216, %s219
      %p228 = scmp.eq.s32.totalorder %s29, 1
      %p229 = por %p227, %p228
      %p230 = scmp.ne.s32.totalorder %s219, %s220
      %p231 = scmp.eq.s32.totalorder %s29, 0
      %p232 = por %p230, %p231
      %p233 = scmp.ne.s32.totalorder %s219, %s220
      %p234 = scmp.eq.s32.totalorder %s30, 1
      %p235 = por %p233, %p234
      %p237 = scmp.ne.s32.totalorder %s220, %s236
      %p238 = scmp.eq.s32.totalorder %s30, 0
      %p239 = por %p237, %p238
      %p240 = scmp.le.s32.totalorder 1, %s24
      %p241 = scmp.lt.s32.totalorder %s24, 3
      %p242 = pnand %p240, %p241
      %p243 = pneg %p242
      // Predicated region
      $region9: #{tpu_custom_call.1} parent=5 // pred_check
        _
      $region10: #{tpu_custom_call.1} parent=5 // pred_check_branch
        %245 = sbr.rel (%p242) target = $region12
      $region11: #{tpu_custom_call.1} parent=5 // pred_region
        %s246 = ssub.s32 %s24, 1
        // Predicated region
        $region13: #{tpu_custom_call.1} parent=11 // pred_check
          %p247 = pneg %p120
        $region14: #{tpu_custom_call.1} parent=11 // pred_check_branch
          %249 = sbr.rel (%p247) target = $region16
        $region15: #{tpu_custom_call.1} parent=11 // pred_region
          %s251 = ssub.s32 1024, 1024
          %252 = vsyncadd [#allocation10], %s251
          %s253 = sshll.u32 [#allocation11], 4
          %s254 = int_to_ptr.vmem [resolvable:$true] %s253
          %259 = dma.hbm_to_vmem [thread:$0]  %s2, 1024, %s254, [#allocation10], 128, 128, 8
        $region16: #{tpu_custom_call.1} parent=11 // pred_fallthru
          _
        // Predicated region
        $region17: #{tpu_custom_call.1} parent=11 // pred_check
          %p260 = pneg %p141
        $region18: #{tpu_custom_call.1} parent=11 // pred_check_branch
          %262 = sbr.rel (%p260) target = $region20
        $region19: #{tpu_custom_call.1} parent=11 // pred_region
          %s264 = ssub.s32 512, 512
          %265 = vsyncadd [#allocation13], %s264
          %s266 = sshll.u32 [#allocation12], 4
          %s267 = int_to_ptr.vmem [resolvable:$true] %s266
          %272 = dma.hbm_to_vmem [thread:$0]  %s3, 512, %s267, [#allocation13], 128, 128, 8
        $region20: #{tpu_custom_call.1} parent=11 // pred_fallthru
          _
        // Predicated region
        $region21: #{tpu_custom_call.1} parent=11 // pred_check
          %p273 = pneg %p162
        $region22: #{tpu_custom_call.1} parent=11 // pred_check_branch
          %275 = sbr.rel (%p273) target = $region24
        $region23: #{tpu_custom_call.1} parent=11 // pred_region
          %s277 = ssub.s32 512, 512
          %278 = vsyncadd [#allocation13], %s277
          %s279 = sshll.u32 [#allocation14], 4
          %s280 = int_to_ptr.vmem [resolvable:$true] %s279
          %285 = dma.hbm_to_vmem [thread:$0]  %s4, 512, %s280, [#allocation13], 128, 128, 8
        $region24: #{tpu_custom_call.1} parent=11 // pred_fallthru
          _
        // Predicated region
        $region25: #{tpu_custom_call.1} parent=11 // pred_check
          %p286 = pneg %p183
        $region26: #{tpu_custom_call.1} parent=11 // pred_check_branch
          %288 = sbr.rel (%p286) target = $region28
        $region27: #{tpu_custom_call.1} parent=11 // pred_region
          %s290 = ssub.s32 1024, 1024
          %291 = vsyncadd [#allocation16], %s290
          %s292 = sshll.u32 [#allocation15], 4
          %s293 = int_to_ptr.vmem [resolvable:$true] %s292
          %298 = dma.hbm_to_vmem [thread:$0]  %s5, 1024, %s293, [#allocation16], 128, 128, 8
        $region28: #{tpu_custom_call.1} parent=11 // pred_fallthru
          _
        // Predicated region
        $region29: #{tpu_custom_call.1} parent=11 // pred_check
          %p299 = pneg %p204
        $region30: #{tpu_custom_call.1} parent=11 // pred_check_branch
          %301 = sbr.rel (%p299) target = $region32
        $region31: #{tpu_custom_call.1} parent=11 // pred_region
          _
        $region32: #{tpu_custom_call.1} parent=11 // pred_fallthru
          _
      $region12: #{tpu_custom_call.1} parent=5 // pred_fallthru
        _
      %p302 = scmp.lt.s32.totalorder %s24, 2
      // Predicated region
      $region33: #{tpu_custom_call.1} parent=5 // pred_check
        %p303 = pneg %p302
      $region34: #{tpu_custom_call.1} parent=5 // pred_check_branch
        %305 = sbr.rel (%p303) target = $region36
      $region35: #{tpu_custom_call.1} parent=5 // pred_region
        // Predicated region
        $region37: #{tpu_custom_call.1} parent=35 // pred_check
          %p306 = pneg %p65
        $region38: #{tpu_custom_call.1} parent=35 // pred_check_branch
          %308 = sbr.rel (%p306) target = $region40
        $region39: #{tpu_custom_call.1} parent=35 // pred_region
          %s309 = sand.u32 %s55, 1
          %s310 = scalar_lea.sflag [#allocation7], %s309
          %s311 = sand.u32 %s55, 1
          %s312 = smul.addr %s311, 16
          %s313 = scalar_lea.vmem [#allocation6], %s312
          %s314 = smul.u32 2, %s32
          %s316 = ssub.s32 256, 256
          %317 = vsyncadd %s310, %s316
          %s318 = smul.addr %s31, 2
          %s319 = sadd.s32 %s314, %s318
          %s320 = smul.addr %s319, 128
          %s321 = scalar_lea.hbm %s0, %s320
          %s322 = sshll.u32 %s313, 4
          %s323 = int_to_ptr.vmem [resolvable:$true] %s322
          %328 = dma.hbm_to_vmem [thread:$0]  %s321, 256, %s323, %s310, 128, 128, 8
        $region40: #{tpu_custom_call.1} parent=35 // pred_fallthru
          _
        // Predicated region
        $region41: #{tpu_custom_call.1} parent=35 // pred_check
          %p329 = pneg %p93
        $region42: #{tpu_custom_call.1} parent=35 // pred_check_branch
          %331 = sbr.rel (%p329) target = $region44
        $region43: #{tpu_custom_call.1} parent=35 // pred_region
          %s332 = sand.u32 %s24, 1
          %s333 = scalar_lea.sflag [#allocation10], %s332
          %s334 = sand.u32 %s83, 1
          %s335 = smul.addr %s334, 32
          %s336 = scalar_lea.vmem [#allocation9], %s335
          %s338 = ssub.s32 512, 512
          %339 = vsyncadd %s333, %s338
          %s340 = smul.addr %s31, 4
          %s341 = sadd.s32 %s33, %s340
          %s342 = smul.addr %s341, 128
          %s343 = scalar_lea.hbm %s1, %s342
          %s344 = sshll.u32 %s336, 4
          %s345 = int_to_ptr.vmem [resolvable:$true] %s344
          %350 = dma.hbm_to_vmem [thread:$0]  %s343, 512, %s345, %s333, 128, 128, 8
        $region44: #{tpu_custom_call.1} parent=35 // pred_fallthru
          _
      $region36: #{tpu_custom_call.1} parent=5 // pred_fallthru
        _
      %p351 = scmp.le.s32.totalorder 1, %s24
      %p352 = scmp.lt.s32.totalorder %s24, 3
      %p353 = pnand %p351, %p352
      %p354 = pneg %p353
      // Predicated region
      $region45: #{tpu_custom_call.1} parent=5 // pred_check
        _
      $region46: #{tpu_custom_call.1} parent=5 // pred_check_branch
        %356 = sbr.rel (%p353) target = $region48
      $region47: #{tpu_custom_call.1} parent=5 // pred_region
        %s357 = ssub.s32 %s24, 1
        %s358 = sand.u32 %s58, 1
        %s359 = scalar_lea.sflag [#allocation7], %s358
        %s360 = sand.u32 %s58, 1
        %s361 = smul.addr %s360, 16
        %s362 = scalar_lea.vmem [#allocation6], %s361
        // Predicated region
        $region49: #{tpu_custom_call.1} parent=47 // pred_check
          %p363 = pneg %p71
        $region50: #{tpu_custom_call.1} parent=47 // pred_check_branch
          %365 = sbr.rel (%p363) target = $region52
        $region51: #{tpu_custom_call.1} parent=47 // pred_region
          %366 = dma.done %s359, 256
        $region52: #{tpu_custom_call.1} parent=47 // pred_fallthru
          _
        %s367 = sand.u32 %s29, 1
        %s368 = scalar_lea.sflag [#allocation10], %s367
        %s369 = sand.u32 %s86, 1
        %s370 = smul.addr %s369, 32
        %s371 = scalar_lea.vmem [#allocation9], %s370
        // Predicated region
        $region53: #{tpu_custom_call.1} parent=47 // pred_check
          %p372 = pneg %p99
        $region54: #{tpu_custom_call.1} parent=47 // pred_check_branch
          %374 = sbr.rel (%p372) target = $region56
        $region55: #{tpu_custom_call.1} parent=47 // pred_region
          %375 = dma.done %s368, 512
        $region56: #{tpu_custom_call.1} parent=47 // pred_fallthru
          _
        // Predicated region
        $region57: #{tpu_custom_call.1} parent=47 // pred_check
          %p376 = pneg %p120
        $region58: #{tpu_custom_call.1} parent=47 // pred_check_branch
          %378 = sbr.rel (%p376) target = $region60
        $region59: #{tpu_custom_call.1} parent=47 // pred_region
          %379 = dma.done [#allocation10], 1024
        $region60: #{tpu_custom_call.1} parent=47 // pred_fallthru
          _
        // Predicated region
        $region61: #{tpu_custom_call.1} parent=47 // pred_check
          %p380 = pneg %p141
        $region62: #{tpu_custom_call.1} parent=47 // pred_check_branch
          %382 = sbr.rel (%p380) target = $region64
        $region63: #{tpu_custom_call.1} parent=47 // pred_region
          %383 = dma.done [#allocation13], 512
        $region64: #{tpu_custom_call.1} parent=47 // pred_fallthru
          _
        // Predicated region
        $region65: #{tpu_custom_call.1} parent=47 // pred_check
          %p384 = pneg %p162
        $region66: #{tpu_custom_call.1} parent=47 // pred_check_branch
          %386 = sbr.rel (%p384) target = $region68
        $region67: #{tpu_custom_call.1} parent=47 // pred_region
          %387 = dma.done [#allocation13], 512
        $region68: #{tpu_custom_call.1} parent=47 // pred_fallthru
          _
        // Predicated region
        $region69: #{tpu_custom_call.1} parent=47 // pred_check
          %p388 = pneg %p183
        $region70: #{tpu_custom_call.1} parent=47 // pred_check_branch
          %390 = sbr.rel (%p388) target = $region72
        $region71: #{tpu_custom_call.1} parent=47 // pred_region
          %391 = dma.done [#allocation16], 1024
        $region72: #{tpu_custom_call.1} parent=47 // pred_fallthru
          _
        %s392 = sand.u32 %s58, 1
        %s393 = scalar_lea.sflag [#allocation7], %s392
        %s394 = sand.u32 %s58, 1
        %s395 = smul.addr %s394, 16
        %s396 = scalar_lea.vmem [#allocation6], %s395
        %p397 = pneg %p71
        %p398 = pneg %p68
        %s399 = sand.u32 %s29, 1
        %s400 = scalar_lea.sflag [#allocation10], %s399
        %s401 = sand.u32 %s86, 1
        %s402 = smul.addr %s401, 32
        %s403 = scalar_lea.vmem [#allocation9], %s402
        %p404 = pneg %p99
        %p405 = pneg %p96
        %p406 = pneg %p120
        %p407 = pneg %p117
        %p408 = pneg %p141
        %p409 = pneg %p138
        %p410 = pneg %p162
        %p411 = pneg %p159
        %p412 = pneg %p183
        %p413 = pneg %p180
        %p414 = pneg %p204
        %p415 = pneg %p201
        %p416 = pneg %p232
        %p417 = pneg %p229
        %s418 = sand.u32 %s219, 1
        %s419 = scalar_lea.sflag [#allocation8], %s418
        %s420 = sand.u32 %s219, 1
        %s421 = smul.addr %s420, 16
        %s422 = scalar_lea.vmem [#allocation17], %s421
        %s423 = smul.u32 2, %s35
        %s424 = smul.u32 2, %s35
        %p425 = scmp.eq.s32.totalorder %s36, 0
        // Predicated region
        $region73: #{tpu_custom_call.1} parent=47 // pred_check
          %p426 = pneg %p425
        $region74: #{tpu_custom_call.1} parent=47 // pred_check_branch
          %428 = sbr.rel (%p426) target = $region76
        $region75: #{tpu_custom_call.1} parent=47 // pred_region
          %v429 = vld [vmem:[%s362] sm:$0xff]
          %v430 = vld [vmem:[%s362 + $0x8] sm:$0xff]
          %v431 = vld [vmem:[#allocation11] sm:$0xff]
          %v432 = vld [vmem:[#allocation11 + $0x8] sm:$0xff]
          %v433 = vld [vmem:[#allocation11 + $0x10] sm:$0xff]
          %v434 = vld [vmem:[#allocation11 + $0x18] sm:$0xff]
          %v435 = vld [vmem:[#allocation11 + $0x20] sm:$0xff]
          %v436 = vld [vmem:[#allocation11 + $0x28] sm:$0xff]
          %v437 = vld [vmem:[#allocation11 + $0x30] sm:$0xff]
          %v438 = vld [vmem:[#allocation11 + $0x38] sm:$0xff]
          %vm439 = vcmask 523264
          %v441 = vsel %vm439, %v429, 0
          %v444 = vsel %vm439, %v430, 0
          %446 = vmatprep.subr.mxu0 0.0
          %447 = vmatpush1.msra.mxu0 %v431
          %448 = vmatprep.subr.mxu0 0.0
          %449 = vmatpush1.msra.mxu0 %v432
          %450 = vmatprep.subr.mxu0 0.0
          %451 = vmatpush1.msra.mxu0 %v433
          %452 = vmatprep.subr.mxu0 0.0
          %453 = vmatpush1.msra.mxu0 %v434
          %454 = vmatprep.subr.mxu0 0.0
          %455 = vmatpush1.msra.mxu0 %v435
          %456 = vmatprep.subr.mxu0 0.0
          %457 = vmatpush1.msra.mxu0 %v436
          %458 = vmatprep.subr.mxu0 0.0
          %459 = vmatpush1.msra.mxu0 %v437
          %460 = vmatprep.subr.mxu0 0.0
          %461 = vmatpush1.msra.mxu0 %v438
          %462 = vmatprep.subr.mxu0 0.0
          %463 = vmatpush1.msra.mxu0 0.0
          %464 = vmatprep.subr.mxu0 0.0
          %465 = vmatpush1.msra.mxu0 0.0
          %466 = vmatprep.subr.mxu0 0.0
          %467 = vmatpush1.msra.mxu0 0.0
          %468 = vmatprep.subr.mxu0 0.0
          %469 = vmatpush1.msra.mxu0 0.0
          %470 = vmatprep.subr.mxu0 0.0
          %471 = vmatpush1.msra.mxu0 0.0
          %472 = vmatprep.subr.mxu0 0.0
          %473 = vmatpush1.msra.mxu0 0.0
          %474 = vmatprep.subr.mxu0 0.0
          %475 = vmatpush1.msra.mxu0 0.0
          %476 = vmatprep.subr.mxu0 0.0
          %477 = vmatpush1.msra.mxu0 0.0
          %478 = vmatprep.subr.mxu0 0.0
          %479 = vmatpush1.msra.mxu0 0.0
          %480 = vmatprep.subr.mxu0 0.0
          %481 = vmatpush1.msra.mxu0 0.0
          %482 = vmatprep.subr.mxu0 0.0
          %483 = vmatpush1.msra.mxu0 0.0
          %484 = vmatprep.subr.mxu0 0.0
          %485 = vmatpush1.msra.mxu0 0.0
          %486 = vmatprep.subr.mxu0 0.0
          %487 = vmatpush1.msra.mxu0 0.0
          %488 = vmatprep.subr.mxu0 0.0
          %489 = vmatpush1.msra.mxu0 0.0
          %490 = vmatprep.subr.mxu0 0.0
          %491 = vmatpush1.msra.mxu0 0.0
          %492 = vmatprep.subr.mxu0 0.0
          %493 = vmatpush1.msra.mxu0 0.0
          %494 = vmatprep.subr.mxu0 0.0
          %495 = vmatpush1.msra.mxu0 0.0
          %496 = vmatprep.subr.mxu0 0.0
          %497 = vmatpush1.msra.mxu0 0.0
          %498 = vmatprep.subr.mxu0 0.0
          %499 = vmatpush1.msra.mxu0 0.0
          %500 = vmatprep.subr.mxu0 0.0
          %501 = vmatpush1.msra.mxu0 0.0
          %502 = vmatprep.subr.mxu0 0.0
          %503 = vmatpush1.msra.mxu0 0.0
          %504 = vmatprep.subr.mxu0 0.0
          %505 = vmatpush1.msra.mxu0 0.0
          %506 = vmatprep.subr.mxu0 0.0
          %507 = vmatpush1.msra.mxu0 0.0
          %508 = vmatprep.subr.mxu0 0.0
          %509 = vmatpush1.msra.mxu0 0.0
          %510 = vmatprep.mubr.f32.mxu0 0.0
          %511 = vmatmul.mubr.f32.gmra.mrb[0].mxu0 %v441
          %v512 = vpop.f32.mrb[0].mxu0
          %v513 = vadd.f32 0.0, %v512
          %v514 = vpop.f32.mrb[0].mxu0
          %515 = vmatprep.mubr.f32.mxu0 0.0
          %516 = vmatmul.mubr.f32.gmra.mrb[0].mxu0 %v444
          %v517 = vpop.f32.mrb[0].mxu0
          %v518 = vadd.f32 0.0, %v517
          %v519 = vpop.f32.mrb[0].mxu0
          %520 = vdwg.mxu0
          %v521 = vmul.f32 %v513, 0.25
          %v522 = vmul.f32 %v518, 0.25
          %523 = vst.msk [vmem:[#allocation2] sm:$0xff] %vm439, %v521
          %524 = vst.msk [vmem:[#allocation2 + $0x8] sm:$0xff] %vm439, %v522
          %vm525 = vcmask 31744
          %526 = vst.msk [vmem:[#allocation4] sm:$0xff] %vm525, -inf
          %527 = vst.msk [vmem:[#allocation4 + $0x8] sm:$0xff] %vm525, -inf
          %528 = vst.msk [vmem:[#allocation5] sm:$0xff] %vm525, 0.0
          %529 = vst.msk [vmem:[#allocation5 + $0x8] sm:$0xff] %vm525, 0.0
          %530 = vst.msk [vmem:[#allocation3] sm:$0xff] %vm439, 0.0
          %531 = vst.msk [vmem:[#allocation3 + $0x8] sm:$0xff] %vm439, 0.0
        $region76: #{tpu_custom_call.1} parent=47 // pred_fallthru
          _
        %v532 = vld [vmem:[%s371] sm:$0xff]
        %v533 = vld [vmem:[%s371 + $0x8] sm:$0xff]
        %v534 = vld [vmem:[%s371 + $0x10] sm:$0xff]
        %v535 = vld [vmem:[%s371 + $0x18] sm:$0xff]
        %v536 = vld [vmem:[#allocation12] sm:$0xff]
        %v537 = vld [vmem:[#allocation12 + $0x8] sm:$0xff]
        %v538 = vld [vmem:[#allocation12 + $0x10] sm:$0xff]
        %v539 = vld [vmem:[#allocation12 + $0x18] sm:$0xff]
        %vm540 = vcmask 261120
        %v542 = vsel %vm540, %v532, 0
        %v545 = vsel %vm540, %v533, 0
        %v548 = vsel %vm540, %v534, 0
        %v551 = vsel %vm540, %v535, 0
        %553 = vmatprep.subr.mxu0 0.0
        %554 = vmatpush1.msra.mxu0 %v536
        %555 = vmatprep.subr.mxu0 0.0
        %556 = vmatpush1.msra.mxu0 %v537
        %557 = vmatprep.subr.mxu0 0.0
        %558 = vmatpush1.msra.mxu0 %v538
        %559 = vmatprep.subr.mxu0 0.0
        %560 = vmatpush1.msra.mxu0 %v539
        %561 = vmatprep.subr.mxu0 0.0
        %562 = vmatpush1.msra.mxu0 0.0
        %563 = vmatprep.subr.mxu0 0.0
        %564 = vmatpush1.msra.mxu0 0.0
        %565 = vmatprep.subr.mxu0 0.0
        %566 = vmatpush1.msra.mxu0 0.0
        %567 = vmatprep.subr.mxu0 0.0
        %568 = vmatpush1.msra.mxu0 0.0
        %569 = vmatprep.subr.mxu0 0.0
        %570 = vmatpush1.msra.mxu0 0.0
        %571 = vmatprep.subr.mxu0 0.0
        %572 = vmatpush1.msra.mxu0 0.0
        %573 = vmatprep.subr.mxu0 0.0
        %574 = vmatpush1.msra.mxu0 0.0
        %575 = vmatprep.subr.mxu0 0.0
        %576 = vmatpush1.msra.mxu0 0.0
        %577 = vmatprep.subr.mxu0 0.0
        %578 = vmatpush1.msra.mxu0 0.0
        %579 = vmatprep.subr.mxu0 0.0
        %580 = vmatpush1.msra.mxu0 0.0
        %581 = vmatprep.subr.mxu0 0.0
        %582 = vmatpush1.msra.mxu0 0.0
        %583 = vmatprep.subr.mxu0 0.0
        %584 = vmatpush1.msra.mxu0 0.0
        %585 = vmatprep.subr.mxu0 0.0
        %586 = vmatpush1.msra.mxu0 0.0
        %587 = vmatprep.subr.mxu0 0.0
        %588 = vmatpush1.msra.mxu0 0.0
        %589 = vmatprep.subr.mxu0 0.0
        %590 = vmatpush1.msra.mxu0 0.0
        %591 = vmatprep.subr.mxu0 0.0
        %592 = vmatpush1.msra.mxu0 0.0
        %593 = vmatprep.subr.mxu0 0.0
        %594 = vmatpush1.msra.mxu0 0.0
        %595 = vmatprep.subr.mxu0 0.0
        %596 = vmatpush1.msra.mxu0 0.0
        %597 = vmatprep.subr.mxu0 0.0
        %598 = vmatpush1.msra.mxu0 0.0
        %599 = vmatprep.subr.mxu0 0.0
        %600 = vmatpush1.msra.mxu0 0.0
        %601 = vmatprep.subr.mxu0 0.0
        %602 = vmatpush1.msra.mxu0 0.0
        %603 = vmatprep.subr.mxu0 0.0
        %604 = vmatpush1.msra.mxu0 0.0
        %605 = vmatprep.subr.mxu0 0.0
        %606 = vmatpush1.msra.mxu0 0.0
        %607 = vmatprep.subr.mxu0 0.0
        %608 = vmatpush1.msra.mxu0 0.0
        %609 = vmatprep.subr.mxu0 0.0
        %610 = vmatpush1.msra.mxu0 0.0
        %611 = vmatprep.subr.mxu0 0.0
        %612 = vmatpush1.msra.mxu0 0.0
        %613 = vmatprep.subr.mxu0 0.0
        %614 = vmatpush1.msra.mxu0 0.0
        %615 = vmatprep.subr.mxu0 0.0
        %616 = vmatpush1.msra.mxu0 0.0
        %617 = vmatprep.mubr.f32.mxu0 0.0
        %618 = vmatmul.mubr.f32.gmra.mrb[0].mxu0 %v542
        %v619 = vpop.f32.mrb[0].mxu0
        %v620 = vadd.f32 0.0, %v619
        %v621 = vpop.f32.mrb[0].mxu0
        %622 = vmatprep.mubr.f32.mxu0 0.0
        %623 = vmatmul.mubr.f32.gmra.mrb[0].mxu0 %v545
        %v624 = vpop.f32.mrb[0].mxu0
        %v625 = vadd.f32 0.0, %v624
        %v626 = vpop.f32.mrb[0].mxu0
        %627 = vmatprep.mubr.f32.mxu0 0.0
        %628 = vmatmul.mubr.f32.gmra.mrb[0].mxu0 %v548
        %v629 = vpop.f32.mrb[0].mxu0
        %v630 = vadd.f32 0.0, %v629
        %v631 = vpop.f32.mrb[0].mxu0
        %632 = vmatprep.mubr.f32.mxu0 0.0
        %633 = vmatmul.mubr.f32.gmra.mrb[0].mxu0 %v551
        %v634 = vpop.f32.mrb[0].mxu0
        %v635 = vadd.f32 0.0, %v634
        %v636 = vpop.f32.mrb[0].mxu0
        %637 = vdwg.mxu0
        %v638 = vld [vmem:[#allocation14] sm:$0xff]
        %v639 = vld [vmem:[#allocation14 + $0x8] sm:$0xff]
        %v640 = vld [vmem:[#allocation14 + $0x10] sm:$0xff]
        %v641 = vld [vmem:[#allocation14 + $0x18] sm:$0xff]
        %642 = vmatprep.subr.mxu0 0.0
        %643 = vmatpush1.msra.mxu0 %v638
        %644 = vmatprep.subr.mxu0 0.0
        %645 = vmatpush1.msra.mxu0 %v639
        %646 = vmatprep.subr.mxu0 0.0
        %647 = vmatpush1.msra.mxu0 %v640
        %648 = vmatprep.subr.mxu0 0.0
        %649 = vmatpush1.msra.mxu0 %v641
        %650 = vmatprep.subr.mxu0 0.0
        %651 = vmatpush1.msra.mxu0 0.0
        %652 = vmatprep.subr.mxu0 0.0
        %653 = vmatpush1.msra.mxu0 0.0
        %654 = vmatprep.subr.mxu0 0.0
        %655 = vmatpush1.msra.mxu0 0.0
        %656 = vmatprep.subr.mxu0 0.0
        %657 = vmatpush1.msra.mxu0 0.0
        %658 = vmatprep.subr.mxu0 0.0
        %659 = vmatpush1.msra.mxu0 0.0
        %660 = vmatprep.subr.mxu0 0.0
        %661 = vmatpush1.msra.mxu0 0.0
        %662 = vmatprep.subr.mxu0 0.0
        %663 = vmatpush1.msra.mxu0 0.0
        %664 = vmatprep.subr.mxu0 0.0
        %665 = vmatpush1.msra.mxu0 0.0
        %666 = vmatprep.subr.mxu0 0.0
        %667 = vmatpush1.msra.mxu0 0.0
        %668 = vmatprep.subr.mxu0 0.0
        %669 = vmatpush1.msra.mxu0 0.0
        %670 = vmatprep.subr.mxu0 0.0
        %671 = vmatpush1.msra.mxu0 0.0
        %672 = vmatprep.subr.mxu0 0.0
        %673 = vmatpush1.msra.mxu0 0.0
        %674 = vmatprep.subr.mxu0 0.0
        %675 = vmatpush1.msra.mxu0 0.0
        %676 = vmatprep.subr.mxu0 0.0
        %677 = vmatpush1.msra.mxu0 0.0
        %678 = vmatprep.subr.mxu0 0.0
        %679 = vmatpush1.msra.mxu0 0.0
        %680 = vmatprep.subr.mxu0 0.0
        %681 = vmatpush1.msra.mxu0 0.0
        %682 = vmatprep.subr.mxu0 0.0
        %683 = vmatpush1.msra.mxu0 0.0
        %684 = vmatprep.subr.mxu0 0.0
        %685 = vmatpush1.msra.mxu0 0.0
        %686 = vmatprep.subr.mxu0 0.0
        %687 = vmatpush1.msra.mxu0 0.0
        %688 = vmatprep.subr.mxu0 0.0
        %689 = vmatpush1.msra.mxu0 0.0
        %690 = vmatprep.subr.mxu0 0.0
        %691 = vmatpush1.msra.mxu0 0.0
        %692 = vmatprep.subr.mxu0 0.0
        %693 = vmatpush1.msra.mxu0 0.0
        %694 = vmatprep.subr.mxu0 0.0
        %695 = vmatpush1.msra.mxu0 0.0
        %696 = vmatprep.subr.mxu0 0.0
        %697 = vmatpush1.msra.mxu0 0.0
        %698 = vmatprep.subr.mxu0 0.0
        %699 = vmatpush1.msra.mxu0 0.0
        %700 = vmatprep.subr.mxu0 0.0
        %701 = vmatpush1.msra.mxu0 0.0
        %702 = vmatprep.subr.mxu0 0.0
        %703 = vmatpush1.msra.mxu0 0.0
        %704 = vmatprep.subr.mxu0 0.0
        %705 = vmatpush1.msra.mxu0 0.0
        %706 = vmatprep.mubr.f32.mxu0 0.0
        %707 = vmatmul.mubr.f32.gmra.mrb[0].mxu0 %v542
        %v708 = vpop.f32.mrb[0].mxu0
        %v709 = vadd.f32 0.0, %v708
        %v710 = vpop.f32.mrb[0].mxu0
        %711 = vmatprep.mubr.f32.mxu0 0.0
        %712 = vmatmul.mubr.f32.gmra.mrb[0].mxu0 %v545
        %v713 = vpop.f32.mrb[0].mxu0
        %v714 = vadd.f32 0.0, %v713
        %v715 = vpop.f32.mrb[0].mxu0
        %716 = vmatprep.mubr.f32.mxu0 0.0
        %717 = vmatmul.mubr.f32.gmra.mrb[0].mxu0 %v548
        %v718 = vpop.f32.mrb[0].mxu0
        %v719 = vadd.f32 0.0, %v718
        %v720 = vpop.f32.mrb[0].mxu0
        %721 = vmatprep.mubr.f32.mxu0 0.0
        %722 = vmatmul.mubr.f32.gmra.mrb[0].mxu0 %v551
        %v723 = vpop.f32.mrb[0].mxu0
        %v724 = vadd.f32 0.0, %v723
        %v725 = vpop.f32.mrb[0].mxu0
        %726 = vdwg.mxu0
        %v727 = vld [vmem:[#allocation2] sm:$0xff]
        %v728 = vld [vmem:[#allocation2 + $0x8] sm:$0xff]
        %vm729 = vcmask 130048
        %v731 = vsel %vm729, %v727, 0
        %v734 = vsel %vm729, %v728, 0
        %v737 = vsel %vm729, %v620, 0
        %v740 = vsel %vm729, %v625, 0
        %v743 = vsel %vm729, %v630, 0
        %v746 = vsel %vm729, %v635, 0
        %748 = vmatprep.subr.mxu0 0.0
        %749 = vmatpush1.xpose.msra.mxu0 %v737
        %750 = vmatprep.subr.mxu0 0.0
        %751 = vmatpush1.xpose.msra.mxu0 %v740
        %752 = vmatprep.subr.mxu0 0.0
        %753 = vmatpush1.xpose.msra.mxu0 %v743
        %754 = vmatprep.subr.mxu0 0.0
        %755 = vmatpush1.xpose.msra.mxu0 %v746
        %756 = vmatprep.subr.mxu0 0.0
        %757 = vmatpush1.xpose.msra.mxu0 0.0
        %758 = vmatprep.subr.mxu0 0.0
        %759 = vmatpush1.xpose.msra.mxu0 0.0
        %760 = vmatprep.subr.mxu0 0.0
        %761 = vmatpush1.xpose.msra.mxu0 0.0
        %762 = vmatprep.subr.mxu0 0.0
        %763 = vmatpush1.xpose.msra.mxu0 0.0
        %764 = vmatprep.subr.mxu0 0.0
        %765 = vmatpush1.xpose.msra.mxu0 0.0
        %766 = vmatprep.subr.mxu0 0.0
        %767 = vmatpush1.xpose.msra.mxu0 0.0
        %768 = vmatprep.subr.mxu0 0.0
        %769 = vmatpush1.xpose.msra.mxu0 0.0
        %770 = vmatprep.subr.mxu0 0.0
        %771 = vmatpush1.xpose.msra.mxu0 0.0
        %772 = vmatprep.subr.mxu0 0.0
        %773 = vmatpush1.xpose.msra.mxu0 0.0
        %774 = vmatprep.subr.mxu0 0.0
        %775 = vmatpush1.xpose.msra.mxu0 0.0
        %776 = vmatprep.subr.mxu0 0.0
        %777 = vmatpush1.xpose.msra.mxu0 0.0
        %778 = vmatprep.subr.mxu0 0.0
        %779 = vmatpush1.xpose.msra.mxu0 0.0
        %780 = vmatprep.subr.mxu0 0.0
        %781 = vmatpush1.xpose.msra.mxu0 0.0
        %782 = vmatprep.subr.mxu0 0.0
        %783 = vmatpush1.xpose.msra.mxu0 0.0
        %784 = vmatprep.subr.mxu0 0.0
        %785 = vmatpush1.xpose.msra.mxu0 0.0
        %786 = vmatprep.subr.mxu0 0.0
        %787 = vmatpush1.xpose.msra.mxu0 0.0
        %788 = vmatprep.subr.mxu0 0.0
        %789 = vmatpush1.xpose.msra.mxu0 0.0
        %790 = vmatprep.subr.mxu0 0.0
        %791 = vmatpush1.xpose.msra.mxu0 0.0
        %792 = vmatprep.subr.mxu0 0.0
        %793 = vmatpush1.xpose.msra.mxu0 0.0
        %794 = vmatprep.subr.mxu0 0.0
        %795 = vmatpush1.xpose.msra.mxu0 0.0
        %796 = vmatprep.subr.mxu0 0.0
        %797 = vmatpush1.xpose.msra.mxu0 0.0
        %798 = vmatprep.subr.mxu0 0.0
        %799 = vmatpush1.xpose.msra.mxu0 0.0
        %800 = vmatprep.subr.mxu0 0.0
        %801 = vmatpush1.xpose.msra.mxu0 0.0
        %802 = vmatprep.subr.mxu0 0.0
        %803 = vmatpush1.xpose.msra.mxu0 0.0
        %804 = vmatprep.subr.mxu0 0.0
        %805 = vmatpush1.xpose.msra.mxu0 0.0
        %806 = vmatprep.subr.mxu0 0.0
        %807 = vmatpush1.xpose.msra.mxu0 0.0
        %808 = vmatprep.subr.mxu0 0.0
        %809 = vmatpush1.xpose.msra.mxu0 0.0
        %810 = vmatprep.subr.mxu0 0.0
        %811 = vmatpush1.xpose.msra.mxu0 0.0
        %812 = vmatprep.mubr.f32.mxu0 0.0
        %813 = vmatmul.mubr.f32.gmra.mrb[0].mxu0 %v731
        %v814 = vpop.f32.mrb[0].mxu0
        %v815 = vadd.f32 0.0, %v814
        %v816 = vpop.f32.mrb[0].mxu0
        %817 = vmatprep.mubr.f32.mxu0 0.0
        %818 = vmatmul.mubr.f32.gmra.mrb[0].mxu0 %v734
        %v819 = vpop.f32.mrb[0].mxu0
        %v820 = vadd.f32 0.0, %v819
        %v821 = vpop.f32.mrb[0].mxu0
        %822 = vdwg.mxu0
        %v823 = vld [vmem:[#allocation4] sm:$0xff]
        %v824 = vld [vmem:[#allocation4 + $0x8] sm:$0xff]
        %v825 = vsel %vm540, %v815, -inf
        %826 = vmax.xlane.f32.xlu0 %v825
        %v827 = vpop.xlane.xlu0 %826
        %v828 = vsel %vm540, %v820, -inf
        %829 = vmax.xlane.f32.xlu0 %v828
        %v830 = vpop.xlane.xlu0 %829
        %v831 = vmax.f32 %v823, %v827
        %v832 = vmax.f32 %v824, %v830
        %v833 = vsub.f32 %v823, %v831
        %v834 = vsub.f32 %v824, %v832
        %v835 = vmul.f32 %v833, 1.442695
        %v836 = vpow.pop %v835
        %v837 = vmul.f32 %v834, 1.442695
        %v838 = vpow.pop %v837
        %840 = vset.pattern.permute.xlu0 0
        %841 = vperm.xlu0 %840, %v831
        %v842 = vpop.permute.xlu0 %841
        %845 = vset.pattern.permute.xlu0 0
        %846 = vperm.xlu0 %845, %v832
        %v847 = vpop.permute.xlu0 %846
        %v849 = vsub.f32 %v815, %v842
        %v850 = vsub.f32 %v820, %v847
        %v851 = vmul.f32 %v849, 1.442695
        %v852 = vpow.pop %v851
        %v853 = vmul.f32 %v850, 1.442695
        %v854 = vpow.pop %v853
        %v855 = vld [vmem:[#allocation5] sm:$0xff]
        %v856 = vld [vmem:[#allocation5 + $0x8] sm:$0xff]
        %v857 = vmul.f32 %v836, %v855
        %v858 = vmul.f32 %v838, %v856
        %v859 = vsel %vm540, %v852, 0.0
        %860 = vadd.xlane.f32.xlu0 %v859
        %v861 = vpop.xlane.xlu0 %860
        %v862 = vsel %vm540, %v854, 0.0
        %863 = vadd.xlane.f32.xlu0 %v862
        %v864 = vpop.xlane.xlu0 %863
        %v865 = vadd.f32 %v857, %v861
        %v866 = vadd.f32 %v858, %v864
        %vm867 = vcmask 7168
        %868 = vst.msk [vmem:[#allocation5] sm:$0xff] %vm867, %v865
        %869 = vst.msk [vmem:[#allocation5 + $0x8] sm:$0xff] %vm867, %v866
        %v870 = vld [vmem:[#allocation3] sm:$0xff]
        %v871 = vld [vmem:[#allocation3 + $0x8] sm:$0xff]
        %873 = vset.pattern.permute.xlu0 0
        %874 = vperm.xlu0 %873, %v836
        %v875 = vpop.permute.xlu0 %874
        %878 = vset.pattern.permute.xlu0 0
        %879 = vperm.xlu0 %878, %v838
        %v880 = vpop.permute.xlu0 %879
        %v882 = vmul.f32 %v875, %v870
        %v883 = vmul.f32 %v880, %v871
        %v885 = vsel %vm540, %v852, 0
        %v888 = vsel %vm540, %v854, 0
        %890 = vmatprep.subr.mxu0 0.0
        %891 = vmatpush1.msra.mxu0 %v709
        %892 = vmatprep.subr.mxu0 0.0
        %893 = vmatpush1.msra.mxu0 %v714
        %894 = vmatprep.subr.mxu0 0.0
        %895 = vmatpush1.msra.mxu0 %v719
        %896 = vmatprep.subr.mxu0 0.0
        %897 = vmatpush1.msra.mxu0 %v724
        %898 = vmatprep.subr.mxu0 0.0
        %899 = vmatpush1.msra.mxu0 0.0
        %900 = vmatprep.subr.mxu0 0.0
        %901 = vmatpush1.msra.mxu0 0.0
        %902 = vmatprep.subr.mxu0 0.0
        %903 = vmatpush1.msra.mxu0 0.0
        %904 = vmatprep.subr.mxu0 0.0
        %905 = vmatpush1.msra.mxu0 0.0
        %906 = vmatprep.subr.mxu0 0.0
        %907 = vmatpush1.msra.mxu0 0.0
        %908 = vmatprep.subr.mxu0 0.0
        %909 = vmatpush1.msra.mxu0 0.0
        %910 = vmatprep.subr.mxu0 0.0
        %911 = vmatpush1.msra.mxu0 0.0
        %912 = vmatprep.subr.mxu0 0.0
        %913 = vmatpush1.msra.mxu0 0.0
        %914 = vmatprep.subr.mxu0 0.0
        %915 = vmatpush1.msra.mxu0 0.0
        %916 = vmatprep.subr.mxu0 0.0
        %917 = vmatpush1.msra.mxu0 0.0
        %918 = vmatprep.subr.mxu0 0.0
        %919 = vmatpush1.msra.mxu0 0.0
        %920 = vmatprep.subr.mxu0 0.0
        %921 = vmatpush1.msra.mxu0 0.0
        %922 = vmatprep.subr.mxu0 0.0
        %923 = vmatpush1.msra.mxu0 0.0
        %924 = vmatprep.subr.mxu0 0.0
        %925 = vmatpush1.msra.mxu0 0.0
        %926 = vmatprep.subr.mxu0 0.0
        %927 = vmatpush1.msra.mxu0 0.0
        %928 = vmatprep.subr.mxu0 0.0
        %929 = vmatpush1.msra.mxu0 0.0
        %930 = vmatprep.subr.mxu0 0.0
        %931 = vmatpush1.msra.mxu0 0.0
        %932 = vmatprep.subr.mxu0 0.0
        %933 = vmatpush1.msra.mxu0 0.0
        %934 = vmatprep.subr.mxu0 0.0
        %935 = vmatpush1.msra.mxu0 0.0
        %936 = vmatprep.subr.mxu0 0.0
        %937 = vmatpush1.msra.mxu0 0.0
        %938 = vmatprep.subr.mxu0 0.0
        %939 = vmatpush1.msra.mxu0 0.0
        %940 = vmatprep.subr.mxu0 0.0
        %941 = vmatpush1.msra.mxu0 0.0
        %942 = vmatprep.subr.mxu0 0.0
        %943 = vmatpush1.msra.mxu0 0.0
        %944 = vmatprep.subr.mxu0 0.0
        %945 = vmatpush1.msra.mxu0 0.0
        %946 = vmatprep.subr.mxu0 0.0
        %947 = vmatpush1.msra.mxu0 0.0
        %948 = vmatprep.subr.mxu0 0.0
        %949 = vmatpush1.msra.mxu0 0.0
        %950 = vmatprep.subr.mxu0 0.0
        %951 = vmatpush1.msra.mxu0 0.0
        %952 = vmatprep.subr.mxu0 0.0
        %953 = vmatpush1.msra.mxu0 0.0
        %954 = vmatprep.mubr.f32.mxu0 0.0
        %955 = vmatmul.mubr.f32.gmra.mrb[0].mxu0 %v885
        %v956 = vpop.f32.mrb[0].mxu0
        %v957 = vadd.f32 0.0, %v956
        %v958 = vpop.f32.mrb[0].mxu0
        %959 = vmatprep.mubr.f32.mxu0 0.0
        %960 = vmatmul.mubr.f32.gmra.mrb[0].mxu0 %v888
        %v961 = vpop.f32.mrb[0].mxu0
        %v962 = vadd.f32 0.0, %v961
        %v963 = vpop.f32.mrb[0].mxu0
        %964 = vdwg.mxu0
        %v965 = vadd.f32 %v882, %v957
        %v966 = vadd.f32 %v883, %v962
        %967 = vst.msk [vmem:[#allocation3] sm:$0xff] %vm729, %v965
        %968 = vst.msk [vmem:[#allocation3 + $0x8] sm:$0xff] %vm729, %v966
        %969 = vst.msk [vmem:[#allocation4] sm:$0xff] %vm867, %v831
        %970 = vst.msk [vmem:[#allocation4 + $0x8] sm:$0xff] %vm867, %v832
        %971 = vrot.lane.b32.xlu0 %v727, 112
        %v972 = vpop.permute.xlu0 %971
        %973 = vrot.lane.b32.xlu0 %v728, 112
        %v974 = vpop.permute.xlu0 %973
        %975 = vrot.lane.b32.xlu0 %v620, 112
        %v976 = vpop.permute.xlu0 %975
        %977 = vrot.lane.b32.xlu0 %v625, 112
        %v978 = vpop.permute.xlu0 %977
        %979 = vrot.lane.b32.xlu0 %v630, 112
        %v980 = vpop.permute.xlu0 %979
        %981 = vrot.lane.b32.xlu0 %v635, 112
        %v982 = vpop.permute.xlu0 %981
        %v983 = vsel %vm729, %v972, 0
        %v985 = vsel %vm729, %v974, 0
        %v987 = vsel %vm729, %v976, 0
        %v989 = vsel %vm729, %v978, 0
        %v991 = vsel %vm729, %v980, 0
        %v993 = vsel %vm729, %v982, 0
        %995 = vmatprep.subr.mxu0 0.0
        %996 = vmatpush1.xpose.msra.mxu0 %v987
        %997 = vmatprep.subr.mxu0 0.0
        %998 = vmatpush1.xpose.msra.mxu0 %v989
        %999 = vmatprep.subr.mxu0 0.0
        %1000 = vmatpush1.xpose.msra.mxu0 %v991
        %1001 = vmatprep.subr.mxu0 0.0
        %1002 = vmatpush1.xpose.msra.mxu0 %v993
        %1003 = vmatprep.subr.mxu0 0.0
        %1004 = vmatpush1.xpose.msra.mxu0 0.0
        %1005 = vmatprep.subr.mxu0 0.0
        %1006 = vmatpush1.xpose.msra.mxu0 0.0
        %1007 = vmatprep.subr.mxu0 0.0
        %1008 = vmatpush1.xpose.msra.mxu0 0.0
        %1009 = vmatprep.subr.mxu0 0.0
        %1010 = vmatpush1.xpose.msra.mxu0 0.0
        %1011 = vmatprep.subr.mxu0 0.0
        %1012 = vmatpush1.xpose.msra.mxu0 0.0
        %1013 = vmatprep.subr.mxu0 0.0
        %1014 = vmatpush1.xpose.msra.mxu0 0.0
        %1015 = vmatprep.subr.mxu0 0.0
        %1016 = vmatpush1.xpose.msra.mxu0 0.0
        %1017 = vmatprep.subr.mxu0 0.0
        %1018 = vmatpush1.xpose.msra.mxu0 0.0
        %1019 = vmatprep.subr.mxu0 0.0
        %1020 = vmatpush1.xpose.msra.mxu0 0.0
        %1021 = vmatprep.subr.mxu0 0.0
        %1022 = vmatpush1.xpose.msra.mxu0 0.0
        %1023 = vmatprep.subr.mxu0 0.0
        %1024 = vmatpush1.xpose.msra.mxu0 0.0
        %1025 = vmatprep.subr.mxu0 0.0
        %1026 = vmatpush1.xpose.msra.mxu0 0.0
        %1027 = vmatprep.subr.mxu0 0.0
        %1028 = vmatpush1.xpose.msra.mxu0 0.0
        %1029 = vmatprep.subr.mxu0 0.0
        %1030 = vmatpush1.xpose.msra.mxu0 0.0
        %1031 = vmatprep.subr.mxu0 0.0
        %1032 = vmatpush1.xpose.msra.mxu0 0.0
        %1033 = vmatprep.subr.mxu0 0.0
        %1034 = vmatpush1.xpose.msra.mxu0 0.0
        %1035 = vmatprep.subr.mxu0 0.0
        %1036 = vmatpush1.xpose.msra.mxu0 0.0
        %1037 = vmatprep.subr.mxu0 0.0
        %1038 = vmatpush1.xpose.msra.mxu0 0.0
        %1039 = vmatprep.subr.mxu0 0.0
        %1040 = vmatpush1.xpose.msra.mxu0 0.0
        %1041 = vmatprep.subr.mxu0 0.0
        %1042 = vmatpush1.xpose.msra.mxu0 0.0
        %1043 = vmatprep.subr.mxu0 0.0
        %1044 = vmatpush1.xpose.msra.mxu0 0.0
        %1045 = vmatprep.subr.mxu0 0.0
        %1046 = vmatpush1.xpose.msra.mxu0 0.0
        %1047 = vmatprep.subr.mxu0 0.0
        %1048 = vmatpush1.xpose.msra.mxu0 0.0
        %1049 = vmatprep.subr.mxu0 0.0
        %1050 = vmatpush1.xpose.msra.mxu0 0.0
        %1051 = vmatprep.subr.mxu0 0.0
        %1052 = vmatpush1.xpose.msra.mxu0 0.0
        %1053 = vmatprep.subr.mxu0 0.0
        %1054 = vmatpush1.xpose.msra.mxu0 0.0
        %1055 = vmatprep.subr.mxu0 0.0
        %1056 = vmatpush1.xpose.msra.mxu0 0.0
        %1057 = vmatprep.subr.mxu0 0.0
        %1058 = vmatpush1.xpose.msra.mxu0 0.0
        %1059 = vmatprep.mubr.f32.mxu0 0.0
        %1060 = vmatmul.mubr.f32.gmra.mrb[0].mxu0 %v983
        %v1061 = vpop.f32.mrb[0].mxu0
        %v1062 = vadd.f32 0.0, %v1061
        %v1063 = vpop.f32.mrb[0].mxu0
        %1064 = vmatprep.mubr.f32.mxu0 0.0
        %1065 = vmatmul.mubr.f32.gmra.mrb[0].mxu0 %v985
        %v1066 = vpop.f32.mrb[0].mxu0
        %v1067 = vadd.f32 0.0, %v1066
        %v1068 = vpop.f32.mrb[0].mxu0
        %1069 = vdwg.mxu0
        %v1070 = vld [vmem:[#allocation4] sm:$0xff]
        %v1071 = vld [vmem:[#allocation4 + $0x8] sm:$0xff]
        %v1072 = vsel %vm540, %v1062, -inf
        %1073 = vmax.xlane.f32.xlu0 %v1072
        %v1074 = vpop.xlane.xlu0 %1073
        %v1075 = vsel %vm540, %v1067, -inf
        %1076 = vmax.xlane.f32.xlu0 %v1075
        %v1077 = vpop.xlane.xlu0 %1076
        %v1078 = vmax.f32 %v1070, %v1074
        %v1079 = vmax.f32 %v1071, %v1077
        %v1080 = vsub.f32 %v1070, %v1078
        %v1081 = vsub.f32 %v1071, %v1079
        %v1082 = vmul.f32 %v1080, 1.442695
        %v1083 = vpow.pop %v1082
        %v1084 = vmul.f32 %v1081, 1.442695
        %v1085 = vpow.pop %v1084
        %1087 = vset.pattern.permute.xlu0 1
        %1088 = vperm.xlu0 %1087, %v1078
        %v1089 = vpop.permute.xlu0 %1088
        %1092 = vset.pattern.permute.xlu0 1
        %1093 = vperm.xlu0 %1092, %v1079
        %v1094 = vpop.permute.xlu0 %1093
        %v1096 = vsub.f32 %v1062, %v1089
        %v1097 = vsub.f32 %v1067, %v1094
        %v1098 = vmul.f32 %v1096, 1.442695
        %v1099 = vpow.pop %v1098
        %v1100 = vmul.f32 %v1097, 1.442695
        %v1101 = vpow.pop %v1100
        %v1102 = vld [vmem:[#allocation5] sm:$0xff]
        %v1103 = vld [vmem:[#allocation5 + $0x8] sm:$0xff]
        %v1104 = vmul.f32 %v1083, %v1102
        %v1105 = vmul.f32 %v1085, %v1103
        %v1106 = vsel %vm540, %v1099, 0.0
        %1107 = vadd.xlane.f32.xlu0 %v1106
        %v1108 = vpop.xlane.xlu0 %1107
        %v1109 = vsel %vm540, %v1101, 0.0
        %1110 = vadd.xlane.f32.xlu0 %v1109
        %v1111 = vpop.xlane.xlu0 %1110
        %v1112 = vadd.f32 %v1104, %v1108
        %v1113 = vadd.f32 %v1105, %v1111
        %vm1114 = vcmask 15368
        %1115 = vst.msk [vmem:[#allocation5] sm:$0xff] %vm1114, %v1112
        %1116 = vst.msk [vmem:[#allocation5 + $0x8] sm:$0xff] %vm1114, %v1113
        %v1117 = vld [vmem:[#allocation3] sm:$0xff]
        %v1118 = vld [vmem:[#allocation3 + $0x8] sm:$0xff]
        %1120 = vset.pattern.permute.xlu0 1
        %1121 = vperm.xlu0 %1120, %v1083
        %v1122 = vpop.permute.xlu0 %1121
        %1125 = vset.pattern.permute.xlu0 1
        %1126 = vperm.xlu0 %1125, %v1085
        %v1127 = vpop.permute.xlu0 %1126
        %v1129 = vmul.f32 %v1122, %v1117
        %v1130 = vmul.f32 %v1127, %v1118
        %1135 = vrot.lane.b32.xlu0 %v709, 112
        %v1136 = vpop.permute.xlu0 %1135
        %1137 = vrot.lane.b32.xlu0 %v714, 112
        %v1138 = vpop.permute.xlu0 %1137
        %1139 = vrot.lane.b32.xlu0 %v719, 112
        %v1140 = vpop.permute.xlu0 %1139
        %1141 = vrot.lane.b32.xlu0 %v724, 112
        %v1142 = vpop.permute.xlu0 %1141
        %v1148 = vsel %vm540, %v1099, 0
        %v1151 = vsel %vm540, %v1101, 0
        %1153 = vmatprep.subr.mxu0 0.0
        %1154 = vmatpush1.msra.mxu0 %v1136
        %1155 = vmatprep.subr.mxu0 0.0
        %1156 = vmatpush1.msra.mxu0 %v1138
        %1157 = vmatprep.subr.mxu0 0.0
        %1158 = vmatpush1.msra.mxu0 %v1140
        %1159 = vmatprep.subr.mxu0 0.0
        %1160 = vmatpush1.msra.mxu0 %v1142
        %1161 = vmatprep.subr.mxu0 0.0
        %1162 = vmatpush1.msra.mxu0 0.0
        %1163 = vmatprep.subr.mxu0 0.0
        %1164 = vmatpush1.msra.mxu0 0.0
        %1165 = vmatprep.subr.mxu0 0.0
        %1166 = vmatpush1.msra.mxu0 0.0
        %1167 = vmatprep.subr.mxu0 0.0
        %1168 = vmatpush1.msra.mxu0 0.0
        %1169 = vmatprep.subr.mxu0 0.0
        %1170 = vmatpush1.msra.mxu0 0.0
        %1171 = vmatprep.subr.mxu0 0.0
        %1172 = vmatpush1.msra.mxu0 0.0
        %1173 = vmatprep.subr.mxu0 0.0
        %1174 = vmatpush1.msra.mxu0 0.0
        %1175 = vmatprep.subr.mxu0 0.0
        %1176 = vmatpush1.msra.mxu0 0.0
        %1177 = vmatprep.subr.mxu0 0.0
        %1178 = vmatpush1.msra.mxu0 0.0
        %1179 = vmatprep.subr.mxu0 0.0
        %1180 = vmatpush1.msra.mxu0 0.0
        %1181 = vmatprep.subr.mxu0 0.0
        %1182 = vmatpush1.msra.mxu0 0.0
        %1183 = vmatprep.subr.mxu0 0.0
        %1184 = vmatpush1.msra.mxu0 0.0
        %1185 = vmatprep.subr.mxu0 0.0
        %1186 = vmatpush1.msra.mxu0 0.0
        %1187 = vmatprep.subr.mxu0 0.0
        %1188 = vmatpush1.msra.mxu0 0.0
        %1189 = vmatprep.subr.mxu0 0.0
        %1190 = vmatpush1.msra.mxu0 0.0
        %1191 = vmatprep.subr.mxu0 0.0
        %1192 = vmatpush1.msra.mxu0 0.0
        %1193 = vmatprep.subr.mxu0 0.0
        %1194 = vmatpush1.msra.mxu0 0.0
        %1195 = vmatprep.subr.mxu0 0.0
        %1196 = vmatpush1.msra.mxu0 0.0
        %1197 = vmatprep.subr.mxu0 0.0
        %1198 = vmatpush1.msra.mxu0 0.0
        %1199 = vmatprep.subr.mxu0 0.0
        %1200 = vmatpush1.msra.mxu0 0.0
        %1201 = vmatprep.subr.mxu0 0.0
        %1202 = vmatpush1.msra.mxu0 0.0
        %1203 = vmatprep.subr.mxu0 0.0
        %1204 = vmatpush1.msra.mxu0 0.0
        %1205 = vmatprep.subr.mxu0 0.0
        %1206 = vmatpush1.msra.mxu0 0.0
        %1207 = vmatprep.subr.mxu0 0.0
        %1208 = vmatpush1.msra.mxu0 0.0
        %1209 = vmatprep.subr.mxu0 0.0
        %1210 = vmatpush1.msra.mxu0 0.0
        %1211 = vmatprep.subr.mxu0 0.0
        %1212 = vmatpush1.msra.mxu0 0.0
        %1213 = vmatprep.subr.mxu0 0.0
        %1214 = vmatpush1.msra.mxu0 0.0
        %1215 = vmatprep.subr.mxu0 0.0
        %1216 = vmatpush1.msra.mxu0 0.0
        %1217 = vmatprep.mubr.f32.mxu0 0.0
        %1218 = vmatmul.mubr.f32.gmra.mrb[0].mxu0 %v1148
        %v1219 = vpop.f32.mrb[0].mxu0
        %v1220 = vadd.f32 0.0, %v1219
        %v1221 = vpop.f32.mrb[0].mxu0
        %1222 = vmatprep.mubr.f32.mxu0 0.0
        %1223 = vmatmul.mubr.f32.gmra.mrb[0].mxu0 %v1151
        %v1224 = vpop.f32.mrb[0].mxu0
        %v1225 = vadd.f32 0.0, %v1224
        %v1226 = vpop.f32.mrb[0].mxu0
        %1227 = vdwg.mxu0
        %1230 = vrot.lane.b32.xlu0 %v1220, 16
        %v1231 = vpop.permute.xlu0 %1230
        %1232 = vrot.lane.b32.xlu0 %v1225, 16
        %v1233 = vpop.permute.xlu0 %1232
        %v1236 = vadd.f32 %v1129, %v1231
        %v1237 = vadd.f32 %v1130, %v1233
        %vm1238 = vcmask 261248
        %1239 = vst.msk [vmem:[#allocation3] sm:$0xff] %vm1238, %v1236
        %1240 = vst.msk [vmem:[#allocation3 + $0x8] sm:$0xff] %vm1238, %v1237
        %1241 = vst.msk [vmem:[#allocation4] sm:$0xff] %vm1114, %v1078
        %1242 = vst.msk [vmem:[#allocation4 + $0x8] sm:$0xff] %vm1114, %v1079
        %1243 = vrot.lane.b32.xlu0 %v727, 96
        %v1244 = vpop.permute.xlu0 %1243
        %1245 = vrot.lane.b32.xlu0 %v728, 96
        %v1246 = vpop.permute.xlu0 %1245
        %1247 = vrot.lane.b32.xlu0 %v620, 96
        %v1248 = vpop.permute.xlu0 %1247
        %1249 = vrot.lane.b32.xlu0 %v625, 96
        %v1250 = vpop.permute.xlu0 %1249
        %1251 = vrot.lane.b32.xlu0 %v630, 96
        %v1252 = vpop.permute.xlu0 %1251
        %1253 = vrot.lane.b32.xlu0 %v635, 96
        %v1254 = vpop.permute.xlu0 %1253
        %v1255 = vsel %vm729, %v1244, 0
        %v1257 = vsel %vm729, %v1246, 0
        %v1259 = vsel %vm729, %v1248, 0
        %v1261 = vsel %vm729, %v1250, 0
        %v1263 = vsel %vm729, %v1252, 0
        %v1265 = vsel %vm729, %v1254, 0
        %1267 = vmatprep.subr.mxu0 0.0
        %1268 = vmatpush1.xpose.msra.mxu0 %v1259
        %1269 = vmatprep.subr.mxu0 0.0
        %1270 = vmatpush1.xpose.msra.mxu0 %v1261
        %1271 = vmatprep.subr.mxu0 0.0
        %1272 = vmatpush1.xpose.msra.mxu0 %v1263
        %1273 = vmatprep.subr.mxu0 0.0
        %1274 = vmatpush1.xpose.msra.mxu0 %v1265
        %1275 = vmatprep.subr.mxu0 0.0
        %1276 = vmatpush1.xpose.msra.mxu0 0.0
        %1277 = vmatprep.subr.mxu0 0.0
        %1278 = vmatpush1.xpose.msra.mxu0 0.0
        %1279 = vmatprep.subr.mxu0 0.0
        %1280 = vmatpush1.xpose.msra.mxu0 0.0
        %1281 = vmatprep.subr.mxu0 0.0
        %1282 = vmatpush1.xpose.msra.mxu0 0.0
        %1283 = vmatprep.subr.mxu0 0.0
        %1284 = vmatpush1.xpose.msra.mxu0 0.0
        %1285 = vmatprep.subr.mxu0 0.0
        %1286 = vmatpush1.xpose.msra.mxu0 0.0
        %1287 = vmatprep.subr.mxu0 0.0
        %1288 = vmatpush1.xpose.msra.mxu0 0.0
        %1289 = vmatprep.subr.mxu0 0.0
        %1290 = vmatpush1.xpose.msra.mxu0 0.0
        %1291 = vmatprep.subr.mxu0 0.0
        %1292 = vmatpush1.xpose.msra.mxu0 0.0
        %1293 = vmatprep.subr.mxu0 0.0
        %1294 = vmatpush1.xpose.msra.mxu0 0.0
        %1295 = vmatprep.subr.mxu0 0.0
        %1296 = vmatpush1.xpose.msra.mxu0 0.0
        %1297 = vmatprep.subr.mxu0 0.0
        %1298 = vmatpush1.xpose.msra.mxu0 0.0
        %1299 = vmatprep.subr.mxu0 0.0
        %1300 = vmatpush1.xpose.msra.mxu0 0.0
        %1301 = vmatprep.subr.mxu0 0.0
        %1302 = vmatpush1.xpose.msra.mxu0 0.0
        %1303 = vmatprep.subr.mxu0 0.0
        %1304 = vmatpush1.xpose.msra.mxu0 0.0
        %1305 = vmatprep.subr.mxu0 0.0
        %1306 = vmatpush1.xpose.msra.mxu0 0.0
        %1307 = vmatprep.subr.mxu0 0.0
        %1308 = vmatpush1.xpose.msra.mxu0 0.0
        %1309 = vmatprep.subr.mxu0 0.0
        %1310 = vmatpush1.xpose.msra.mxu0 0.0
        %1311 = vmatprep.subr.mxu0 0.0
        %1312 = vmatpush1.xpose.msra.mxu0 0.0
        %1313 = vmatprep.subr.mxu0 0.0
        %1314 = vmatpush1.xpose.msra.mxu0 0.0
        %1315 = vmatprep.subr.mxu0 0.0
        %1316 = vmatpush1.xpose.msra.mxu0 0.0
        %1317 = vmatprep.subr.mxu0 0.0
        %1318 = vmatpush1.xpose.msra.mxu0 0.0
        %1319 = vmatprep.subr.mxu0 0.0
        %1320 = vmatpush1.xpose.msra.mxu0 0.0
        %1321 = vmatprep.subr.mxu0 0.0
        %1322 = vmatpush1.xpose.msra.mxu0 0.0
        %1323 = vmatprep.subr.mxu0 0.0
        %1324 = vmatpush1.xpose.msra.mxu0 0.0
        %1325 = vmatprep.subr.mxu0 0.0
        %1326 = vmatpush1.xpose.msra.mxu0 0.0
        %1327 = vmatprep.subr.mxu0 0.0
        %1328 = vmatpush1.xpose.msra.mxu0 0.0
        %1329 = vmatprep.subr.mxu0 0.0
        %1330 = vmatpush1.xpose.msra.mxu0 0.0
        %1331 = vmatprep.mubr.f32.mxu0 0.0
        %1332 = vmatmul.mubr.f32.gmra.mrb[0].mxu0 %v1255
        %v1333 = vpop.f32.mrb[0].mxu0
        %v1334 = vadd.f32 0.0, %v1333
        %v1335 = vpop.f32.mrb[0].mxu0
        %1336 = vmatprep.mubr.f32.mxu0 0.0
        %1337 = vmatmul.mubr.f32.gmra.mrb[0].mxu0 %v1257
        %v1338 = vpop.f32.mrb[0].mxu0
        %v1339 = vadd.f32 0.0, %v1338
        %v1340 = vpop.f32.mrb[0].mxu0
        %1341 = vdwg.mxu0
        %v1342 = vld [vmem:[#allocation4] sm:$0xff]
        %v1343 = vld [vmem:[#allocation4 + $0x8] sm:$0xff]
        %v1344 = vsel %vm540, %v1334, -inf
        %1345 = vmax.xlane.f32.xlu0 %v1344
        %v1346 = vpop.xlane.xlu0 %1345
        %v1347 = vsel %vm540, %v1339, -inf
        %1348 = vmax.xlane.f32.xlu0 %v1347
        %v1349 = vpop.xlane.xlu0 %1348
        %v1350 = vmax.f32 %v1342, %v1346
        %v1351 = vmax.f32 %v1343, %v1349
        %v1352 = vsub.f32 %v1342, %v1350
        %v1353 = vsub.f32 %v1343, %v1351
        %v1354 = vmul.f32 %v1352, 1.442695
        %v1355 = vpow.pop %v1354
        %v1356 = vmul.f32 %v1353, 1.442695
        %v1357 = vpow.pop %v1356
        %1359 = vset.pattern.permute.xlu0 2
        %1360 = vperm.xlu0 %1359, %v1350
        %v1361 = vpop.permute.xlu0 %1360
        %1364 = vset.pattern.permute.xlu0 2
        %1365 = vperm.xlu0 %1364, %v1351
        %v1366 = vpop.permute.xlu0 %1365
        %v1368 = vsub.f32 %v1334, %v1361
        %v1369 = vsub.f32 %v1339, %v1366
        %v1370 = vmul.f32 %v1368, 1.442695
        %v1371 = vpow.pop %v1370
        %v1372 = vmul.f32 %v1369, 1.442695
        %v1373 = vpow.pop %v1372
        %v1374 = vld [vmem:[#allocation5] sm:$0xff]
        %v1375 = vld [vmem:[#allocation5 + $0x8] sm:$0xff]
        %v1376 = vmul.f32 %v1355, %v1374
        %v1377 = vmul.f32 %v1357, %v1375
        %v1378 = vsel %vm540, %v1371, 0.0
        %1379 = vadd.xlane.f32.xlu0 %v1378
        %v1380 = vpop.xlane.xlu0 %1379
        %v1381 = vsel %vm540, %v1373, 0.0
        %1382 = vadd.xlane.f32.xlu0 %v1381
        %v1383 = vpop.xlane.xlu0 %1382
        %v1384 = vadd.f32 %v1376, %v1380
        %v1385 = vadd.f32 %v1377, %v1383
        %vm1386 = vcmask 23568
        %1387 = vst.msk [vmem:[#allocation5] sm:$0xff] %vm1386, %v1384
        %1388 = vst.msk [vmem:[#allocation5 + $0x8] sm:$0xff] %vm1386, %v1385
        %v1389 = vld [vmem:[#allocation3] sm:$0xff]
        %v1390 = vld [vmem:[#allocation3 + $0x8] sm:$0xff]
        %1392 = vset.pattern.permute.xlu0 2
        %1393 = vperm.xlu0 %1392, %v1355
        %v1394 = vpop.permute.xlu0 %1393
        %1397 = vset.pattern.permute.xlu0 2
        %1398 = vperm.xlu0 %1397, %v1357
        %v1399 = vpop.permute.xlu0 %1398
        %v1401 = vmul.f32 %v1394, %v1389
        %v1402 = vmul.f32 %v1399, %v1390
        %1403 = vrot.lane.b32.xlu0 %v709, 96
        %v1404 = vpop.permute.xlu0 %1403
        %1405 = vrot.lane.b32.xlu0 %v714, 96
        %v1406 = vpop.permute.xlu0 %1405
        %1407 = vrot.lane.b32.xlu0 %v719, 96
        %v1408 = vpop.permute.xlu0 %1407
        %1409 = vrot.lane.b32.xlu0 %v724, 96
        %v1410 = vpop.permute.xlu0 %1409
        %v1416 = vsel %vm540, %v1371, 0
        %v1419 = vsel %vm540, %v1373, 0
        %1421 = vmatprep.subr.mxu0 0.0
        %1422 = vmatpush1.msra.mxu0 %v1404
        %1423 = vmatprep.subr.mxu0 0.0
        %1424 = vmatpush1.msra.mxu0 %v1406
        %1425 = vmatprep.subr.mxu0 0.0
        %1426 = vmatpush1.msra.mxu0 %v1408
        %1427 = vmatprep.subr.mxu0 0.0
        %1428 = vmatpush1.msra.mxu0 %v1410
        %1429 = vmatprep.subr.mxu0 0.0
        %1430 = vmatpush1.msra.mxu0 0.0
        %1431 = vmatprep.subr.mxu0 0.0
        %1432 = vmatpush1.msra.mxu0 0.0
        %1433 = vmatprep.subr.mxu0 0.0
        %1434 = vmatpush1.msra.mxu0 0.0
        %1435 = vmatprep.subr.mxu0 0.0
        %1436 = vmatpush1.msra.mxu0 0.0
        %1437 = vmatprep.subr.mxu0 0.0
        %1438 = vmatpush1.msra.mxu0 0.0
        %1439 = vmatprep.subr.mxu0 0.0
        %1440 = vmatpush1.msra.mxu0 0.0
        %1441 = vmatprep.subr.mxu0 0.0
        %1442 = vmatpush1.msra.mxu0 0.0
        %1443 = vmatprep.subr.mxu0 0.0
        %1444 = vmatpush1.msra.mxu0 0.0
        %1445 = vmatprep.subr.mxu0 0.0
        %1446 = vmatpush1.msra.mxu0 0.0
        %1447 = vmatprep.subr.mxu0 0.0
        %1448 = vmatpush1.msra.mxu0 0.0
        %1449 = vmatprep.subr.mxu0 0.0
        %1450 = vmatpush1.msra.mxu0 0.0
        %1451 = vmatprep.subr.mxu0 0.0
        %1452 = vmatpush1.msra.mxu0 0.0
        %1453 = vmatprep.subr.mxu0 0.0
        %1454 = vmatpush1.msra.mxu0 0.0
        %1455 = vmatprep.subr.mxu0 0.0
        %1456 = vmatpush1.msra.mxu0 0.0
        %1457 = vmatprep.subr.mxu0 0.0
        %1458 = vmatpush1.msra.mxu0 0.0
        %1459 = vmatprep.subr.mxu0 0.0
        %1460 = vmatpush1.msra.mxu0 0.0
        %1461 = vmatprep.subr.mxu0 0.0
        %1462 = vmatpush1.msra.mxu0 0.0
        %1463 = vmatprep.subr.mxu0 0.0
        %1464 = vmatpush1.msra.mxu0 0.0
        %1465 = vmatprep.subr.mxu0 0.0
        %1466 = vmatpush1.msra.mxu0 0.0
        %1467 = vmatprep.subr.mxu0 0.0
        %1468 = vmatpush1.msra.mxu0 0.0
        %1469 = vmatprep.subr.mxu0 0.0
        %1470 = vmatpush1.msra.mxu0 0.0
        %1471 = vmatprep.subr.mxu0 0.0
        %1472 = vmatpush1.msra.mxu0 0.0
        %1473 = vmatprep.subr.mxu0 0.0
        %1474 = vmatpush1.msra.mxu0 0.0
        %1475 = vmatprep.subr.mxu0 0.0
        %1476 = vmatpush1.msra.mxu0 0.0
        %1477 = vmatprep.subr.mxu0 0.0
        %1478 = vmatpush1.msra.mxu0 0.0
        %1479 = vmatprep.subr.mxu0 0.0
        %1480 = vmatpush1.msra.mxu0 0.0
        %1481 = vmatprep.subr.mxu0 0.0
        %1482 = vmatpush1.msra.mxu0 0.0
        %1483 = vmatprep.subr.mxu0 0.0
        %1484 = vmatpush1.msra.mxu0 0.0
        %1485 = vmatprep.mubr.f32.mxu0 0.0
        %1486 = vmatmul.mubr.f32.gmra.mrb[0].mxu0 %v1416
        %v1487 = vpop.f32.mrb[0].mxu0
        %v1488 = vadd.f32 0.0, %v1487
        %v1489 = vpop.f32.mrb[0].mxu0
        %1490 = vmatprep.mubr.f32.mxu0 0.0
        %1491 = vmatmul.mubr.f32.gmra.mrb[0].mxu0 %v1419
        %v1492 = vpop.f32.mrb[0].mxu0
        %v1493 = vadd.f32 0.0, %v1492
        %v1494 = vpop.f32.mrb[0].mxu0
        %1495 = vdwg.mxu0
        %1498 = vrot.lane.b32.xlu0 %v1488, 32
        %v1499 = vpop.permute.xlu0 %1498
        %1500 = vrot.lane.b32.xlu0 %v1493, 32
        %v1501 = vpop.permute.xlu0 %1500
        %v1504 = vadd.f32 %v1401, %v1499
        %v1505 = vadd.f32 %v1402, %v1501
        %vm1506 = vcmask 392448
        %1507 = vst.msk [vmem:[#allocation3] sm:$0xff] %vm1506, %v1504
        %1508 = vst.msk [vmem:[#allocation3 + $0x8] sm:$0xff] %vm1506, %v1505
        %1509 = vst.msk [vmem:[#allocation4] sm:$0xff] %vm1386, %v1350
        %1510 = vst.msk [vmem:[#allocation4 + $0x8] sm:$0xff] %vm1386, %v1351
        %1511 = vrot.lane.b32.xlu0 %v727, 80
        %v1512 = vpop.permute.xlu0 %1511
        %1513 = vrot.lane.b32.xlu0 %v728, 80
        %v1514 = vpop.permute.xlu0 %1513
        %1515 = vrot.lane.b32.xlu0 %v620, 80
        %v1516 = vpop.permute.xlu0 %1515
        %1517 = vrot.lane.b32.xlu0 %v625, 80
        %v1518 = vpop.permute.xlu0 %1517
        %1519 = vrot.lane.b32.xlu0 %v630, 80
        %v1520 = vpop.permute.xlu0 %1519
        %1521 = vrot.lane.b32.xlu0 %v635, 80
        %v1522 = vpop.permute.xlu0 %1521
        %v1523 = vsel %vm729, %v1512, 0
        %v1525 = vsel %vm729, %v1514, 0
        %v1527 = vsel %vm729, %v1516, 0
        %v1529 = vsel %vm729, %v1518, 0
        %v1531 = vsel %vm729, %v1520, 0
        %v1533 = vsel %vm729, %v1522, 0
        %1535 = vmatprep.subr.mxu0 0.0
        %1536 = vmatpush1.xpose.msra.mxu0 %v1527
        %1537 = vmatprep.subr.mxu0 0.0
        %1538 = vmatpush1.xpose.msra.mxu0 %v1529
        %1539 = vmatprep.subr.mxu0 0.0
        %1540 = vmatpush1.xpose.msra.mxu0 %v1531
        %1541 = vmatprep.subr.mxu0 0.0
        %1542 = vmatpush1.xpose.msra.mxu0 %v1533
        %1543 = vmatprep.subr.mxu0 0.0
        %1544 = vmatpush1.xpose.msra.mxu0 0.0
        %1545 = vmatprep.subr.mxu0 0.0
        %1546 = vmatpush1.xpose.msra.mxu0 0.0
        %1547 = vmatprep.subr.mxu0 0.0
        %1548 = vmatpush1.xpose.msra.mxu0 0.0
        %1549 = vmatprep.subr.mxu0 0.0
        %1550 = vmatpush1.xpose.msra.mxu0 0.0
        %1551 = vmatprep.subr.mxu0 0.0
        %1552 = vmatpush1.xpose.msra.mxu0 0.0
        %1553 = vmatprep.subr.mxu0 0.0
        %1554 = vmatpush1.xpose.msra.mxu0 0.0
        %1555 = vmatprep.subr.mxu0 0.0
        %1556 = vmatpush1.xpose.msra.mxu0 0.0
        %1557 = vmatprep.subr.mxu0 0.0
        %1558 = vmatpush1.xpose.msra.mxu0 0.0
        %1559 = vmatprep.subr.mxu0 0.0
        %1560 = vmatpush1.xpose.msra.mxu0 0.0
        %1561 = vmatprep.subr.mxu0 0.0
        %1562 = vmatpush1.xpose.msra.mxu0 0.0
        %1563 = vmatprep.subr.mxu0 0.0
        %1564 = vmatpush1.xpose.msra.mxu0 0.0
        %1565 = vmatprep.subr.mxu0 0.0
        %1566 = vmatpush1.xpose.msra.mxu0 0.0
        %1567 = vmatprep.subr.mxu0 0.0
        %1568 = vmatpush1.xpose.msra.mxu0 0.0
        %1569 = vmatprep.subr.mxu0 0.0
        %1570 = vmatpush1.xpose.msra.mxu0 0.0
        %1571 = vmatprep.subr.mxu0 0.0
        %1572 = vmatpush1.xpose.msra.mxu0 0.0
        %1573 = vmatprep.subr.mxu0 0.0
        %1574 = vmatpush1.xpose.msra.mxu0 0.0
        %1575 = vmatprep.subr.mxu0 0.0
        %1576 = vmatpush1.xpose.msra.mxu0 0.0
        %1577 = vmatprep.subr.mxu0 0.0
        %1578 = vmatpush1.xpose.msra.mxu0 0.0
        %1579 = vmatprep.subr.mxu0 0.0
        %1580 = vmatpush1.xpose.msra.mxu0 0.0
        %1581 = vmatprep.subr.mxu0 0.0
        %1582 = vmatpush1.xpose.msra.mxu0 0.0
        %1583 = vmatprep.subr.mxu0 0.0
        %1584 = vmatpush1.xpose.msra.mxu0 0.0
        %1585 = vmatprep.subr.mxu0 0.0
        %1586 = vmatpush1.xpose.msra.mxu0 0.0
        %1587 = vmatprep.subr.mxu0 0.0
        %1588 = vmatpush1.xpose.msra.mxu0 0.0
        %1589 = vmatprep.subr.mxu0 0.0
        %1590 = vmatpush1.xpose.msra.mxu0 0.0
        %1591 = vmatprep.subr.mxu0 0.0
        %1592 = vmatpush1.xpose.msra.mxu0 0.0
        %1593 = vmatprep.subr.mxu0 0.0
        %1594 = vmatpush1.xpose.msra.mxu0 0.0
        %1595 = vmatprep.subr.mxu0 0.0
        %1596 = vmatpush1.xpose.msra.mxu0 0.0
        %1597 = vmatprep.subr.mxu0 0.0
        %1598 = vmatpush1.xpose.msra.mxu0 0.0
        %1599 = vmatprep.mubr.f32.mxu0 0.0
        %1600 = vmatmul.mubr.f32.gmra.mrb[0].mxu0 %v1523
        %v1601 = vpop.f32.mrb[0].mxu0
        %v1602 = vadd.f32 0.0, %v1601
        %v1603 = vpop.f32.mrb[0].mxu0
        %1604 = vmatprep.mubr.f32.mxu0 0.0
        %1605 = vmatmul.mubr.f32.gmra.mrb[0].mxu0 %v1525
        %v1606 = vpop.f32.mrb[0].mxu0
        %v1607 = vadd.f32 0.0, %v1606
        %v1608 = vpop.f32.mrb[0].mxu0
        %1609 = vdwg.mxu0
        %v1610 = vld [vmem:[#allocation4] sm:$0xff]
        %v1611 = vld [vmem:[#allocation4 + $0x8] sm:$0xff]
        %v1612 = vsel %vm540, %v1602, -inf
        %1613 = vmax.xlane.f32.xlu0 %v1612
        %v1614 = vpop.xlane.xlu0 %1613
        %v1615 = vsel %vm540, %v1607, -inf
        %1616 = vmax.xlane.f32.xlu0 %v1615
        %v1617 = vpop.xlane.xlu0 %1616
        %v1618 = vmax.f32 %v1610, %v1614
        %v1619 = vmax.f32 %v1611, %v1617
        %v1620 = vsub.f32 %v1610, %v1618
        %v1621 = vsub.f32 %v1611, %v1619
        %v1622 = vmul.f32 %v1620, 1.442695
        %v1623 = vpow.pop %v1622
        %v1624 = vmul.f32 %v1621, 1.442695
        %v1625 = vpow.pop %v1624
        %1627 = vset.pattern.permute.xlu0 3
        %1628 = vperm.xlu0 %1627, %v1618
        %v1629 = vpop.permute.xlu0 %1628
        %1632 = vset.pattern.permute.xlu0 3
        %1633 = vperm.xlu0 %1632, %v1619
        %v1634 = vpop.permute.xlu0 %1633
        %v1636 = vsub.f32 %v1602, %v1629
        %v1637 = vsub.f32 %v1607, %v1634
        %v1638 = vmul.f32 %v1636, 1.442695
        %v1639 = vpow.pop %v1638
        %v1640 = vmul.f32 %v1637, 1.442695
        %v1641 = vpow.pop %v1640
        %v1642 = vld [vmem:[#allocation5] sm:$0xff]
        %v1643 = vld [vmem:[#allocation5 + $0x8] sm:$0xff]
        %v1644 = vmul.f32 %v1623, %v1642
        %v1645 = vmul.f32 %v1625, %v1643
        %v1646 = vsel %vm540, %v1639, 0.0
        %1647 = vadd.xlane.f32.xlu0 %v1646
        %v1648 = vpop.xlane.xlu0 %1647
        %v1649 = vsel %vm540, %v1641, 0.0
        %1650 = vadd.xlane.f32.xlu0 %v1649
        %v1651 = vpop.xlane.xlu0 %1650
        %v1652 = vadd.f32 %v1644, %v1648
        %v1653 = vadd.f32 %v1645, %v1651
        %vm1654 = vcmask 31768
        %1655 = vst.msk [vmem:[#allocation5] sm:$0xff] %vm1654, %v1652
        %1656 = vst.msk [vmem:[#allocation5 + $0x8] sm:$0xff] %vm1654, %v1653
        %v1657 = vld [vmem:[#allocation3] sm:$0xff]
        %v1658 = vld [vmem:[#allocation3 + $0x8] sm:$0xff]
        %1660 = vset.pattern.permute.xlu0 3
        %1661 = vperm.xlu0 %1660, %v1623
        %v1662 = vpop.permute.xlu0 %1661
        %1665 = vset.pattern.permute.xlu0 3
        %1666 = vperm.xlu0 %1665, %v1625
        %v1667 = vpop.permute.xlu0 %1666
        %v1669 = vmul.f32 %v1662, %v1657
        %v1670 = vmul.f32 %v1667, %v1658
        %1671 = vrot.lane.b32.xlu0 %v709, 80
        %v1672 = vpop.permute.xlu0 %1671
        %1673 = vrot.lane.b32.xlu0 %v714, 80
        %v1674 = vpop.permute.xlu0 %1673
        %1675 = vrot.lane.b32.xlu0 %v719, 80
        %v1676 = vpop.permute.xlu0 %1675
        %1677 = vrot.lane.b32.xlu0 %v724, 80
        %v1678 = vpop.permute.xlu0 %1677
        %v1684 = vsel %vm540, %v1639, 0
        %v1687 = vsel %vm540, %v1641, 0
        %1689 = vmatprep.subr.mxu0 0.0
        %1690 = vmatpush1.msra.mxu0 %v1672
        %1691 = vmatprep.subr.mxu0 0.0
        %1692 = vmatpush1.msra.mxu0 %v1674
        %1693 = vmatprep.subr.mxu0 0.0
        %1694 = vmatpush1.msra.mxu0 %v1676
        %1695 = vmatprep.subr.mxu0 0.0
        %1696 = vmatpush1.msra.mxu0 %v1678
        %1697 = vmatprep.subr.mxu0 0.0
        %1698 = vmatpush1.msra.mxu0 0.0
        %1699 = vmatprep.subr.mxu0 0.0
        %1700 = vmatpush1.msra.mxu0 0.0
        %1701 = vmatprep.subr.mxu0 0.0
        %1702 = vmatpush1.msra.mxu0 0.0
        %1703 = vmatprep.subr.mxu0 0.0
        %1704 = vmatpush1.msra.mxu0 0.0
        %1705 = vmatprep.subr.mxu0 0.0
        %1706 = vmatpush1.msra.mxu0 0.0
        %1707 = vmatprep.subr.mxu0 0.0
        %1708 = vmatpush1.msra.mxu0 0.0
        %1709 = vmatprep.subr.mxu0 0.0
        %1710 = vmatpush1.msra.mxu0 0.0
        %1711 = vmatprep.subr.mxu0 0.0
        %1712 = vmatpush1.msra.mxu0 0.0
        %1713 = vmatprep.subr.mxu0 0.0
        %1714 = vmatpush1.msra.mxu0 0.0
        %1715 = vmatprep.subr.mxu0 0.0
        %1716 = vmatpush1.msra.mxu0 0.0
        %1717 = vmatprep.subr.mxu0 0.0
        %1718 = vmatpush1.msra.mxu0 0.0
        %1719 = vmatprep.subr.mxu0 0.0
        %1720 = vmatpush1.msra.mxu0 0.0
        %1721 = vmatprep.subr.mxu0 0.0
        %1722 = vmatpush1.msra.mxu0 0.0
        %1723 = vmatprep.subr.mxu0 0.0
        %1724 = vmatpush1.msra.mxu0 0.0
        %1725 = vmatprep.subr.mxu0 0.0
        %1726 = vmatpush1.msra.mxu0 0.0
        %1727 = vmatprep.subr.mxu0 0.0
        %1728 = vmatpush1.msra.mxu0 0.0
        %1729 = vmatprep.subr.mxu0 0.0
        %1730 = vmatpush1.msra.mxu0 0.0
        %1731 = vmatprep.subr.mxu0 0.0
        %1732 = vmatpush1.msra.mxu0 0.0
        %1733 = vmatprep.subr.mxu0 0.0
        %1734 = vmatpush1.msra.mxu0 0.0
        %1735 = vmatprep.subr.mxu0 0.0
        %1736 = vmatpush1.msra.mxu0 0.0
        %1737 = vmatprep.subr.mxu0 0.0
        %1738 = vmatpush1.msra.mxu0 0.0
        %1739 = vmatprep.subr.mxu0 0.0
        %1740 = vmatpush1.msra.mxu0 0.0
        %1741 = vmatprep.subr.mxu0 0.0
        %1742 = vmatpush1.msra.mxu0 0.0
        %1743 = vmatprep.subr.mxu0 0.0
        %1744 = vmatpush1.msra.mxu0 0.0
        %1745 = vmatprep.subr.mxu0 0.0
        %1746 = vmatpush1.msra.mxu0 0.0
        %1747 = vmatprep.subr.mxu0 0.0
        %1748 = vmatpush1.msra.mxu0 0.0
        %1749 = vmatprep.subr.mxu0 0.0
        %1750 = vmatpush1.msra.mxu0 0.0
        %1751 = vmatprep.subr.mxu0 0.0
        %1752 = vmatpush1.msra.mxu0 0.0
        %1753 = vmatprep.mubr.f32.mxu0 0.0
        %1754 = vmatmul.mubr.f32.gmra.mrb[0].mxu0 %v1684
        %v1755 = vpop.f32.mrb[0].mxu0
        %v1756 = vadd.f32 0.0, %v1755
        %v1757 = vpop.f32.mrb[0].mxu0
        %1758 = vmatprep.mubr.f32.mxu0 0.0
        %1759 = vmatmul.mubr.f32.gmra.mrb[0].mxu0 %v1687
        %v1760 = vpop.f32.mrb[0].mxu0
        %v1761 = vadd.f32 0.0, %v1760
        %v1762 = vpop.f32.mrb[0].mxu0
        %1763 = vdwg.mxu0
        %1766 = vrot.lane.b32.xlu0 %v1756, 48
        %v1767 = vpop.permute.xlu0 %1766
        %1768 = vrot.lane.b32.xlu0 %v1761, 48
        %v1769 = vpop.permute.xlu0 %1768
        %v1772 = vadd.f32 %v1669, %v1767
        %v1773 = vadd.f32 %v1670, %v1769
        %vm1774 = vcmask 523648
        %1775 = vst.msk [vmem:[#allocation3] sm:$0xff] %vm1774, %v1772
        %1776 = vst.msk [vmem:[#allocation3 + $0x8] sm:$0xff] %vm1774, %v1773
        %1777 = vst.msk [vmem:[#allocation4] sm:$0xff] %vm1654, %v1618
        %1778 = vst.msk [vmem:[#allocation4 + $0x8] sm:$0xff] %vm1654, %v1619
        // Predicated region
        $region77: #{tpu_custom_call.1} parent=47 // pred_check
          %p1779 = pneg %p425
        $region78: #{tpu_custom_call.1} parent=47 // pred_check_branch
          %1781 = sbr.rel (%p1779) target = $region80
        $region79: #{tpu_custom_call.1} parent=47 // pred_region
          %v1782 = vld [vmem:[#allocation5] sm:$0xff]
          %v1783 = vld [vmem:[#allocation5 + $0x8] sm:$0xff]
          %v1784 = vrcp.pop %v1782
          %v1785 = vmul.f32 1.0, %v1784
          %v1786 = vrcp.pop %v1783
          %v1787 = vmul.f32 1.0, %v1786
          %v1788 = vld [vmem:[#allocation3] sm:$0xff]
          %v1789 = vld [vmem:[#allocation3 + $0x8] sm:$0xff]
          %1791 = vset.pattern.permute.xlu0 0
          %1792 = vperm.xlu0 %1791, %v1785
          %v1793 = vpop.permute.xlu0 %1792
          %1796 = vset.pattern.permute.xlu0 0
          %1797 = vperm.xlu0 %1796, %v1787
          %v1798 = vpop.permute.xlu0 %1797
          %v1800 = vmul.f32 %v1788, %v1793
          %v1801 = vmul.f32 %v1789, %v1798
          %1802 = vst.msk [vmem:[#allocation3] sm:$0xff] %vm729, %v1800
          %1803 = vst.msk [vmem:[#allocation3 + $0x8] sm:$0xff] %vm729, %v1801
          %v1804 = vld [vmem:[#allocation3] sm:$0xff]
          %v1805 = vld [vmem:[#allocation3 + $0x8] sm:$0xff]
          %1806 = vset.pattern.permute.xlu0 1
          %1807 = vperm.xlu0 %1806, %v1785
          %v1808 = vpop.permute.xlu0 %1807
          %1810 = vset.pattern.permute.xlu0 1
          %1811 = vperm.xlu0 %1810, %v1787
          %v1812 = vpop.permute.xlu0 %1811
          %v1814 = vmul.f32 %v1804, %v1808
          %v1815 = vmul.f32 %v1805, %v1812
          %1816 = vst.msk [vmem:[#allocation3] sm:$0xff] %vm1238, %v1814
          %1817 = vst.msk [vmem:[#allocation3 + $0x8] sm:$0xff] %vm1238, %v1815
          %v1818 = vld [vmem:[#allocation3] sm:$0xff]
          %v1819 = vld [vmem:[#allocation3 + $0x8] sm:$0xff]
          %1820 = vset.pattern.permute.xlu0 2
          %1821 = vperm.xlu0 %1820, %v1785
          %v1822 = vpop.permute.xlu0 %1821
          %1824 = vset.pattern.permute.xlu0 2
          %1825 = vperm.xlu0 %1824, %v1787
          %v1826 = vpop.permute.xlu0 %1825
          %v1828 = vmul.f32 %v1818, %v1822
          %v1829 = vmul.f32 %v1819, %v1826
          %1830 = vst.msk [vmem:[#allocation3] sm:$0xff] %vm1506, %v1828
          %1831 = vst.msk [vmem:[#allocation3 + $0x8] sm:$0xff] %vm1506, %v1829
          %v1832 = vld [vmem:[#allocation3] sm:$0xff]
          %v1833 = vld [vmem:[#allocation3 + $0x8] sm:$0xff]
          %1834 = vset.pattern.permute.xlu0 3
          %1835 = vperm.xlu0 %1834, %v1785
          %v1836 = vpop.permute.xlu0 %1835
          %1838 = vset.pattern.permute.xlu0 3
          %1839 = vperm.xlu0 %1838, %v1787
          %v1840 = vpop.permute.xlu0 %1839
          %v1842 = vmul.f32 %v1832, %v1836
          %v1843 = vmul.f32 %v1833, %v1840
          %1844 = vst.msk [vmem:[#allocation3] sm:$0xff] %vm1774, %v1842
          %1845 = vst.msk [vmem:[#allocation3 + $0x8] sm:$0xff] %vm1774, %v1843
          %v1846 = vld [vmem:[#allocation3] sm:$0xff]
          %v1847 = vld [vmem:[#allocation3 + $0x8] sm:$0xff]
          %v1848 = vld [vmem:[#allocation15] sm:$0xff]
          %v1849 = vld [vmem:[#allocation15 + $0x8] sm:$0xff]
          %v1850 = vld [vmem:[#allocation15 + $0x10] sm:$0xff]
          %v1851 = vld [vmem:[#allocation15 + $0x18] sm:$0xff]
          %v1852 = vld [vmem:[#allocation15 + $0x20] sm:$0xff]
          %v1853 = vld [vmem:[#allocation15 + $0x28] sm:$0xff]
          %v1854 = vld [vmem:[#allocation15 + $0x30] sm:$0xff]
          %v1855 = vld [vmem:[#allocation15 + $0x38] sm:$0xff]
          %v1856 = vld [vmem:[%s6] sm:$0x1]
          %v1858 = vlaneseq
          %v1859 = vshrl.u32 %v1858, 7
          %v1860 = vsub.s32 0, %v1859
          %v1861 = vrot.slane %v1856, %v1860
          %vm1863 = vcmask 523264
          %v1865 = vsel %vm1863, %v1846, 0
          %v1868 = vsel %vm1863, %v1847, 0
          %1870 = vmatprep.subr.mxu0 0.0
          %1871 = vmatpush1.msra.mxu0 %v1848
          %1872 = vmatprep.subr.mxu0 0.0
          %1873 = vmatpush1.msra.mxu0 %v1849
          %1874 = vmatprep.subr.mxu0 0.0
          %1875 = vmatpush1.msra.mxu0 %v1850
          %1876 = vmatprep.subr.mxu0 0.0
          %1877 = vmatpush1.msra.mxu0 %v1851
          %1878 = vmatprep.subr.mxu0 0.0
          %1879 = vmatpush1.msra.mxu0 %v1852
          %1880 = vmatprep.subr.mxu0 0.0
          %1881 = vmatpush1.msra.mxu0 %v1853
          %1882 = vmatprep.subr.mxu0 0.0
          %1883 = vmatpush1.msra.mxu0 %v1854
          %1884 = vmatprep.subr.mxu0 0.0
          %1885 = vmatpush1.msra.mxu0 %v1855
          %1886 = vmatprep.subr.mxu0 0.0
          %1887 = vmatpush1.msra.mxu0 0.0
          %1888 = vmatprep.subr.mxu0 0.0
          %1889 = vmatpush1.msra.mxu0 0.0
          %1890 = vmatprep.subr.mxu0 0.0
          %1891 = vmatpush1.msra.mxu0 0.0
          %1892 = vmatprep.subr.mxu0 0.0
          %1893 = vmatpush1.msra.mxu0 0.0
          %1894 = vmatprep.subr.mxu0 0.0
          %1895 = vmatpush1.msra.mxu0 0.0
          %1896 = vmatprep.subr.mxu0 0.0
          %1897 = vmatpush1.msra.mxu0 0.0
          %1898 = vmatprep.subr.mxu0 0.0
          %1899 = vmatpush1.msra.mxu0 0.0
          %1900 = vmatprep.subr.mxu0 0.0
          %1901 = vmatpush1.msra.mxu0 0.0
          %1902 = vmatprep.subr.mxu0 0.0
          %1903 = vmatpush1.msra.mxu0 0.0
          %1904 = vmatprep.subr.mxu0 0.0
          %1905 = vmatpush1.msra.mxu0 0.0
          %1906 = vmatprep.subr.mxu0 0.0
          %1907 = vmatpush1.msra.mxu0 0.0
          %1908 = vmatprep.subr.mxu0 0.0
          %1909 = vmatpush1.msra.mxu0 0.0
          %1910 = vmatprep.subr.mxu0 0.0
          %1911 = vmatpush1.msra.mxu0 0.0
          %1912 = vmatprep.subr.mxu0 0.0
          %1913 = vmatpush1.msra.mxu0 0.0
          %1914 = vmatprep.subr.mxu0 0.0
          %1915 = vmatpush1.msra.mxu0 0.0
          %1916 = vmatprep.subr.mxu0 0.0
          %1917 = vmatpush1.msra.mxu0 0.0
          %1918 = vmatprep.subr.mxu0 0.0
          %1919 = vmatpush1.msra.mxu0 0.0
          %1920 = vmatprep.subr.mxu0 0.0
          %1921 = vmatpush1.msra.mxu0 0.0
          %1922 = vmatprep.subr.mxu0 0.0
          %1923 = vmatpush1.msra.mxu0 0.0
          %1924 = vmatprep.subr.mxu0 0.0
          %1925 = vmatpush1.msra.mxu0 0.0
          %1926 = vmatprep.subr.mxu0 0.0
          %1927 = vmatpush1.msra.mxu0 0.0
          %1928 = vmatprep.subr.mxu0 0.0
          %1929 = vmatpush1.msra.mxu0 0.0
          %1930 = vmatprep.subr.mxu0 0.0
          %1931 = vmatpush1.msra.mxu0 0.0
          %1932 = vmatprep.subr.mxu0 0.0
          %1933 = vmatpush1.msra.mxu0 0.0
          %1934 = vmatprep.mubr.f32.mxu0 0.0
          %1935 = vmatmul.mubr.f32.gmra.mrb[0].mxu0 %v1865
          %v1936 = vpop.f32.mrb[0].mxu0
          %v1937 = vadd.f32 %v1861, %v1936
          %v1938 = vpop.f32.mrb[0].mxu0
          %1939 = vmatprep.mubr.f32.mxu0 0.0
          %1940 = vmatmul.mubr.f32.gmra.mrb[0].mxu0 %v1868
          %v1941 = vpop.f32.mrb[0].mxu0
          %v1942 = vadd.f32 %v1861, %v1941
          %v1943 = vpop.f32.mrb[0].mxu0
          %1944 = vdwg.mxu0
          %1945 = vst [vmem:[%s422] sm:$0xff] %v1937
          %1946 = vst [vmem:[%s422 + $0x8] sm:$0xff] %v1942
        $region80: #{tpu_custom_call.1} parent=47 // pred_fallthru
          _
        %s1947 = sand.u32 %s219, 1
        %s1948 = scalar_lea.sflag [#allocation8], %s1947
        %s1949 = sand.u32 %s219, 1
        %s1950 = smul.addr %s1949, 16
        %s1951 = scalar_lea.vmem [#allocation17], %s1950
        // Predicated region
        $region81: #{tpu_custom_call.1} parent=47 // pred_check
          %p1952 = pneg %p229
        $region82: #{tpu_custom_call.1} parent=47 // pred_check_branch
          %1954 = sbr.rel (%p1952) target = $region84
        $region83: #{tpu_custom_call.1} parent=47 // pred_region
          %s1955 = smul.u32 2, %s35
          %s1957 = ssub.s32 256, 256
          %1958 = vsyncadd %s1948, %s1957
          %s1959 = smul.addr %s34, 2
          %s1960 = sadd.s32 %s1955, %s1959
          %s1961 = smul.addr %s1960, 128
          %s1962 = scalar_lea.hbm %s7, %s1961
          %s1963 = sshll.u32 %s1951, 4
          %s1964 = int_to_ptr.vmem [resolvable:$true] %s1963
          %1969 = dma.vmem_to_hbm [thread:$0]  %s1964, 256, %s1962, %s1948, 128, 128, 8
        $region84: #{tpu_custom_call.1} parent=47 // pred_fallthru
          _
      $region48: #{tpu_custom_call.1} parent=5 // pred_fallthru
        _
      %p1970 = scmp.le.s32.totalorder 2, %s24
      // Predicated region
      $region85: #{tpu_custom_call.1} parent=5 // pred_check
        %p1971 = pneg %p1970
      $region86: #{tpu_custom_call.1} parent=5 // pred_check_branch
        %1973 = sbr.rel (%p1971) target = $region88
      $region87: #{tpu_custom_call.1} parent=5 // pred_region
        %s1974 = ssub.s32 %s24, 2
        // Predicated region
        $region89: #{tpu_custom_call.1} parent=87 // pred_check
          %p1975 = pneg %p235
        $region90: #{tpu_custom_call.1} parent=87 // pred_check_branch
          %1977 = sbr.rel (%p1975) target = $region92
        $region91: #{tpu_custom_call.1} parent=87 // pred_region
          %s1978 = sand.u32 %s220, 1
          %s1979 = scalar_lea.sflag [#allocation8], %s1978
          %s1980 = sand.u32 %s220, 1
          %s1981 = smul.addr %s1980, 16
          %s1982 = scalar_lea.vmem [#allocation17], %s1981
          %1983 = dma.done %s1979, 256
        $region92: #{tpu_custom_call.1} parent=87 // pred_fallthru
          _
      $region88: #{tpu_custom_call.1} parent=5 // pred_fallthru
        _
    $region6: #{tpu_custom_call.1} parent=1 // loop_footer
      %s28 = sadd.s32 1, %s24
    $region7: #{tpu_custom_call.1} parent=1 // loop_footer_branch
      %23 = sbr.rel target = $region3
    $region8: #{tpu_custom_call.1} parent=1 // loop_exit
      _
    %1984 = vsyncpa [#allocation7], 1
    %s1985 = scalar_lea.sflag [#allocation7], 1
    %1986 = vsyncpa %s1985, 1
    %1987 = vsyncpa [#allocation10], 1
    %s1988 = scalar_lea.sflag [#allocation10], 1
    %1989 = vsyncpa %s1988, 1
    %1990 = vsyncpa [#allocation13], 1
    %1991 = vsyncpa [#allocation16], 1
    %1992 = vsyncpa [#allocation8], 1
    %s1993 = scalar_lea.sflag [#allocation8], 1
    %1994 = vsyncpa %s1993, 1

</llo_original>
